<compile_context>
chip_gen: v6e
topology: v6e:2x2x1
jax: 0.10.0
libtpu: 0.0.40
codegen_flags: <defaults>
</compile_context>

<pallas_src>
import jax
import jax.numpy as jnp
from jax.experimental import pallas as pl
from jax.experimental.pallas import tpu as pltpu

EPS = 1e-5


def b_block_kernel(x_ref, w1_ref, w2_ref, g1_ref, bt1_ref, g2_ref, bt2_ref,
                   fold_ref, foldt_ref, o_ref, xs_ref, h1p_ref):
    """Fused B_Block forward in lane-packed layout.

    x_ref   : (N, H, W*C)  f32   input, lanes packed as w*C + c
    w*_ref  : (3, W*C, W*C) bf16 per-kh conv matrices (kw taps + W-pad folded in)
    g*/bt*  : (1, C)       f32   BN gamma / beta
    fold_ref: (W*C, C)     f32   lane -> channel one-hot (for per-channel stats)
    foldt_ref:(C, W*C)     f32   channel -> lane broadcast
    o_ref   : (N*H, W*C)   f32   output (lane-dense store)
    xs_ref, h1p_ref: (N, H+2, W*C) f32 scratch with a 1-row zero halo in H
    """
    N, H, WC = x_ref.shape
    NH = N * H
    C = fold_ref.shape[1]
    M = NH * (WC // C)            # BN sample count per channel (= N*H*W)
    inv_m = 1.0 / M

    zero_row = jnp.zeros((N, 1, WC), jnp.float32)

    # Stage the input with a 1-row zero halo in H. Only the two halo rows are
    # zero-filled; the interior is written exactly once. (W halo is folded
    # into the weight matrices, so no lane padding exists anywhere.)
    xs_ref[:, 0:1, :] = zero_row
    xs_ref[:, H + 1:H + 2, :] = zero_row
    xs_ref[:, 1:H + 1, :] = x_ref[...]

    fold = fold_ref[...]          # (WC, C)
    foldt = foldt_ref[...]        # (C, WC)

    def conv(src_ref, w_ref):
        # 3 deep-K, lane-dense MXU matmuls (one per kh row tap).
        acc = jnp.zeros((NH, WC), jnp.float32)
        for kh in range(3):
            tap = src_ref[:, kh:kh + H, :].reshape(NH, WC).astype(jnp.bfloat16)
            acc = acc + jnp.dot(tap, w_ref[kh],
                                preferred_element_type=jnp.float32)
        return acc

    def batchnorm(acc, g_ref, bt_ref):
        # One-pass training-mode batch stats: sum & sum-of-squares.
        colsum = jnp.sum(acc, axis=0, keepdims=True)         # (1, WC)
        colsq = jnp.sum(acc * acc, axis=0, keepdims=True)    # (1, WC)
        mean = jnp.dot(colsum, fold, preferred_element_type=jnp.float32) * inv_m  # (1, C)
        ex2 = jnp.dot(colsq, fold, preferred_element_type=jnp.float32) * inv_m
        var = ex2 - mean * mean
        scale_c = g_ref[...] * jax.lax.rsqrt(var + EPS)       # (1, C)
        shift_c = bt_ref[...] - mean * scale_c
        scale_l = jnp.dot(scale_c, foldt, preferred_element_type=jnp.float32)  # (1, WC)
        shift_l = jnp.dot(shift_c, foldt, preferred_element_type=jnp.float32)
        return acc * scale_l + shift_l                        # lane-dense apply

    # ---- conv1 -> bn1 -> relu  (conv bias omitted: cancelled by BN mean) ----
    h1 = jnp.maximum(batchnorm(conv(xs_ref, w1_ref), g1_ref, bt1_ref), 0.0)

    # Stage ReLU output with an H halo for conv2 (halo rows only, interior once).
    h1p_ref[:, 0:1, :] = zero_row
    h1p_ref[:, H + 1:H + 2, :] = zero_row
    h1p_ref[:, 1:H + 1, :] = h1.reshape(N, H, WC)

    # ---- conv2 -> bn2 -> + identity residual, dense (N*H, W*C) store -------
    h2 = batchnorm(conv(h1p_ref, w2_ref), g2_ref, bt2_ref)
    o_ref[...] = x_ref[...].reshape(NH, WC) + h2


def _lane_conv_weights(w_oihw, W):
    """Fold the 3 kw taps and the W-direction zero padding of a 3x3/stride-1/
    pad-1 conv into three (W*Cin, W*Cout) matrices (one per kh) acting on rows
    whose lane index is w*Cin + ci."""
    w_hwio = jnp.transpose(w_oihw, (2, 3, 1, 0)).astype(jnp.float32)  # (3,3,Cin,Cout)
    mats = []
    for kh in range(3):
        m = sum(jnp.kron(jnp.eye(W, k=1 - kw, dtype=jnp.float32), w_hwio[kh, kw])
                for kw in range(3))
        mats.append(m)
    return jnp.stack(mats).astype(jnp.bfloat16)                       # (3, W*Cin, W*Cout)


@jax.jit
def b_block(x_nchw, w1, b1, g1, bt1, w2, b2, g2, bt2):
    """B_Block forward (NCHW in / NCHW out), downsample_net=None, stride=1."""
    # b1/b2 (conv biases) are intentionally unused: a per-channel constant
    # added before training-mode BatchNorm is removed by the mean subtraction.
    _ = (b1, b2)
    N, C, H, W = x_nchw.shape
    Cout = w1.shape[0]
    assert Cout == C, "identity residual requires inlayer == outlayer"
    WC = W * C
    NH = N * H

    # Layout glue only (no jnp.pad): NCHW -> lane-packed (N, H, W*C).
    x_packed = jnp.transpose(x_nchw, (0, 2, 3, 1)).reshape(N, H, WC).astype(jnp.float32)

    w1m = _lane_conv_weights(w1, W)
    w2m = _lane_conv_weights(w2, W)

    # lane <-> channel fold matrices (lane l holds channel l % C).
    lane_c = jnp.arange(WC, dtype=jnp.int32) % C
    fold = (lane_c[:, None] == jnp.arange(C, dtype=jnp.int32)[None, :]).astype(jnp.float32)
    foldt = jnp.transpose(fold)

    vmem = pl.BlockSpec(memory_space=pltpu.MemorySpace.VMEM)
    # TODO(synk): for real ResNet shapes, add a grid over N/H tiles with a
    # two-phase cross-tile BN (sum/sumsq accumulation then normalize) and mark
    # the batch axis "parallel" so v7x's two TensorCores are both used; at this
    # test size everything fits comfortably in VMEM as a single program.
    out2d = pl.pallas_call(
        b_block_kernel,
        out_shape=jax.ShapeDtypeStruct((NH, WC), jnp.float32),
        in_specs=[vmem] * 9,
        out_specs=vmem,
        scratch_shapes=[pltpu.VMEM((N, H + 2, WC), jnp.float32),
                        pltpu.VMEM((N, H + 2, WC), jnp.float32)],
    )(x_packed, w1m, w2m,
      g1.reshape(1, C).astype(jnp.float32), bt1.reshape(1, C).astype(jnp.float32),
      g2.reshape(1, C).astype(jnp.float32), bt2.reshape(1, C).astype(jnp.float32),
      fold, foldt)

    return jnp.transpose(out2d.reshape(N, H, W, C), (0, 3, 1, 2))     # back to NCHW


def reference(x, w1, b1, g1, bt1, w2, b2, g2, bt2):
    """Pure-JAX NCHW reference matching the PyTorch training-mode forward
    (keeps the conv biases, demonstrating they are cancelled by BN)."""
    def conv(x, w, b):
        y = jax.lax.conv_general_dilated(
            x, w, window_strides=(1, 1), padding=((1, 1), (1, 1)),
            dimension_numbers=('NCHW', 'OIHW', 'NCHW'))
        return y + b.reshape(1, -1, 1, 1)

    def bn(x, g, bt):
        m = jnp.mean(x, axis=(0, 2, 3), keepdims=True)
        v = jnp.mean((x - m) ** 2, axis=(0, 2, 3), keepdims=True)
        return (x - m) / jnp.sqrt(v + EPS) * g.reshape(1, -1, 1, 1) + bt.reshape(1, -1, 1, 1)

    out = jax.nn.relu(bn(conv(x, w1, b1), g1, bt1))
    out = bn(conv(out, w2, b2), g2, bt2)
    return x + out


if __name__ == "__main__":
    # Small shapes consistent with the module: batch=2, channels=8, spatial=16x16.
    N, C, H, W = 2, 8, 16, 16
    key = jax.random.PRNGKey(0)
    ks = jax.random.split(key, 9)

    x = jax.random.normal(ks[0], (N, C, H, W), jnp.float32)           # NCHW input
    w1 = 0.1 * jax.random.normal(ks[1], (C, C, 3, 3), jnp.float32)    # conv1.weight (OIHW)
    b1 = 0.1 * jax.random.normal(ks[2], (C,), jnp.float32)            # conv1.bias
    g1 = 1.0 + 0.1 * jax.random.normal(ks[3], (C,), jnp.float32)      # conv1_bn.weight
    bt1 = 0.1 * jax.random.normal(ks[4], (C,), jnp.float32)           # conv1_bn.bias
    w2 = 0.1 * jax.random.normal(ks[5], (C, C, 3, 3), jnp.float32)    # conv2.weight (OIHW)
    b2 = 0.1 * jax.random.normal(ks[6], (C,), jnp.float32)            # conv2.bias
    g2 = 1.0 + 0.1 * jax.random.normal(ks[7], (C,), jnp.float32)      # conv2_bn.weight
    bt2 = 0.1 * jax.random.normal(ks[8], (C,), jnp.float32)           # conv2_bn.bias

    out = jax.block_until_ready(b_block(x, w1, b1, g1, bt1, w2, b2, g2, bt2))
    ref = jax.block_until_ready(reference(x, w1, b1, g1, bt1, w2, b2, g2, bt2))

    assert out.shape == (N, C, H, W)
    assert jnp.all(jnp.isfinite(out))
    max_err = float(jnp.max(jnp.abs(out - ref)))
    assert jnp.allclose(out, ref, rtol=2e-2, atol=3e-2), max_err

    print("KERNEL_OK")
</pallas_src>

<mosaic_0001>
module attributes {stable_mosaic.version = 11 : i64} {
  func.func @b_block_kernel(%arg0: memref<2x16x128xf32, #tpu.memory_space<vmem>>, %arg1: memref<3x128x128xbf16, #tpu.memory_space<vmem>>, %arg2: memref<3x128x128xbf16, #tpu.memory_space<vmem>>, %arg3: memref<1x8xf32, #tpu.memory_space<vmem>>, %arg4: memref<1x8xf32, #tpu.memory_space<vmem>>, %arg5: memref<1x8xf32, #tpu.memory_space<vmem>>, %arg6: memref<1x8xf32, #tpu.memory_space<vmem>>, %arg7: memref<128x8xf32, #tpu.memory_space<vmem>>, %arg8: memref<8x128xf32, #tpu.memory_space<vmem>>, %arg9: memref<32x128xf32, #tpu.memory_space<vmem>>, %arg10: memref<2x18x128xf32, #tpu.memory_space<vmem>>, %arg11: memref<2x18x128xf32, #tpu.memory_space<vmem>>) attributes {dimension_semantics = [], scalar_prefetch = 0 : i64, scratch_operands = 2 : i64, tpu.core_type = #tpu.core_type<tc>} {
    %cst = arith.constant 0.000000e+00 : f32
    %0 = vector.broadcast %cst : f32 to vector<2x1x128xf32>
    %c0 = arith.constant 0 : index
    %c0_0 = arith.constant 0 : index
    %c0_1 = arith.constant 0 : index
    %1 = vector.load %arg10[%c0, %c0_0, %c0_1] : memref<2x18x128xf32, #tpu.memory_space<vmem>>, vector<2x1x128xf32>
    tpu.vector_store %arg10[%c0, %c0_0, %c0_1], %0 {strides = array<i32>} : memref<2x18x128xf32, #tpu.memory_space<vmem>>, vector<2x1x128xf32>,
    %c0_2 = arith.constant 0 : index
    %c17 = arith.constant 17 : index
    %c0_3 = arith.constant 0 : index
    %2 = vector.load %arg10[%c0_2, %c17, %c0_3] : memref<2x18x128xf32, #tpu.memory_space<vmem>>, vector<2x1x128xf32>
    tpu.vector_store %arg10[%c0_2, %c17, %c0_3], %0 {strides = array<i32>} : memref<2x18x128xf32, #tpu.memory_space<vmem>>, vector<2x1x128xf32>,
    %c0_4 = arith.constant 0 : index
    %c0_5 = arith.constant 0 : index
    %c0_6 = arith.constant 0 : index
    %3 = vector.load %arg0[%c0_4, %c0_5, %c0_6] : memref<2x16x128xf32, #tpu.memory_space<vmem>>, vector<2x16x128xf32>
    %c0_7 = arith.constant 0 : index
    %c1 = arith.constant 1 : index
    %c0_8 = arith.constant 0 : index
    %4 = vector.load %arg10[%c0_7, %c1, %c0_8] : memref<2x18x128xf32, #tpu.memory_space<vmem>>, vector<2x16x128xf32>
    tpu.vector_store %arg10[%c0_7, %c1, %c0_8], %3 {strides = array<i32>} : memref<2x18x128xf32, #tpu.memory_space<vmem>>, vector<2x16x128xf32>,
    %c0_9 = arith.constant 0 : index
    %c0_10 = arith.constant 0 : index
    %5 = vector.load %arg7[%c0_9, %c0_10] : memref<128x8xf32, #tpu.memory_space<vmem>>, vector<128x8xf32>
    %c0_11 = arith.constant 0 : index
    %c0_12 = arith.constant 0 : index
    %6 = vector.load %arg8[%c0_11, %c0_12] : memref<8x128xf32, #tpu.memory_space<vmem>>, vector<8x128xf32>
    %cst_13 = arith.constant 0.000000e+00 : f32
    %7 = vector.broadcast %cst_13 : f32 to vector<32x128xf32>
    %c0_14 = arith.constant 0 : index
    %c0_15 = arith.constant 0 : index
    %c0_16 = arith.constant 0 : index
    %8 = vector.load %arg10[%c0_14, %c0_15, %c0_16] : memref<2x18x128xf32, #tpu.memory_space<vmem>>, vector<2x16x128xf32>
    %9 = vector.shape_cast %8 : vector<2x16x128xf32> to vector<32x128xf32>
    %10 = arith.truncf %9 : vector<32x128xf32> to vector<32x128xbf16>
    %c0_17 = arith.constant 0 : index
    %c0_18 = arith.constant 0 : index
    %c0_19 = arith.constant 0 : index
    %11 = vector.load %arg1[%c0_17, %c0_18, %c0_19] : memref<3x128x128xbf16, #tpu.memory_space<vmem>>, vector<1x128x128xbf16>
    %12 = vector.shape_cast %11 : vector<1x128x128xbf16> to vector<128x128xbf16>
    %cst_20 = arith.constant dense<0.000000e+00> : vector<32x128xf32>
    %13 = tpu.matmul %10, %12, %cst_20 {dimension_numbers = #tpu.dot_dimension_numbers<[1], [0], [0], [1], [0, 0, 1, 1], [], []>} : vector<32x128xbf16>, vector<128x128xbf16>, vector<32x128xf32> -> vector<32x128xf32>
    %14 = arith.addf %7, %13 : vector<32x128xf32>
    %c0_21 = arith.constant 0 : index
    %c1_22 = arith.constant 1 : index
    %c0_23 = arith.constant 0 : index
    %15 = vector.load %arg10[%c0_21, %c1_22, %c0_23] : memref<2x18x128xf32, #tpu.memory_space<vmem>>, vector<2x16x128xf32>
    %16 = vector.shape_cast %15 : vector<2x16x128xf32> to vector<32x128xf32>
    %17 = arith.truncf %16 : vector<32x128xf32> to vector<32x128xbf16>
    %c1_24 = arith.constant 1 : index
    %c0_25 = arith.constant 0 : index
    %c0_26 = arith.constant 0 : index
    %18 = vector.load %arg1[%c1_24, %c0_25, %c0_26] : memref<3x128x128xbf16, #tpu.memory_space<vmem>>, vector<1x128x128xbf16>
    %19 = vector.shape_cast %18 : vector<1x128x128xbf16> to vector<128x128xbf16>
    %cst_27 = arith.constant dense<0.000000e+00> : vector<32x128xf32>
    %20 = tpu.matmul %17, %19, %cst_27 {dimension_numbers = #tpu.dot_dimension_numbers<[1], [0], [0], [1], [0, 0, 1, 1], [], []>} : vector<32x128xbf16>, vector<128x128xbf16>, vector<32x128xf32> -> vector<32x128xf32>
    %21 = arith.addf %14, %20 : vector<32x128xf32>
    %c0_28 = arith.constant 0 : index
    %c2 = arith.constant 2 : index
    %c0_29 = arith.constant 0 : index
    %22 = vector.load %arg10[%c0_28, %c2, %c0_29] : memref<2x18x128xf32, #tpu.memory_space<vmem>>, vector<2x16x128xf32>
    %23 = vector.shape_cast %22 : vector<2x16x128xf32> to vector<32x128xf32>
    %24 = arith.truncf %23 : vector<32x128xf32> to vector<32x128xbf16>
    %c2_30 = arith.constant 2 : index
    %c0_31 = arith.constant 0 : index
    %c0_32 = arith.constant 0 : index
    %25 = vector.load %arg1[%c2_30, %c0_31, %c0_32] : memref<3x128x128xbf16, #tpu.memory_space<vmem>>, vector<1x128x128xbf16>
    %26 = vector.shape_cast %25 : vector<1x128x128xbf16> to vector<128x128xbf16>
    %cst_33 = arith.constant dense<0.000000e+00> : vector<32x128xf32>
    %27 = tpu.matmul %24, %26, %cst_33 {dimension_numbers = #tpu.dot_dimension_numbers<[1], [0], [0], [1], [0, 0, 1, 1], [], []>} : vector<32x128xbf16>, vector<128x128xbf16>, vector<32x128xf32> -> vector<32x128xf32>
    %28 = arith.addf %21, %27 : vector<32x128xf32>
    %cst_34 = arith.constant dense<0.000000e+00> : vector<128xf32>
    %29 = vector.multi_reduction <add>, %28, %cst_34 [0] : vector<32x128xf32> to vector<128xf32>
    %30 = vector.shape_cast %29 : vector<128xf32> to vector<1x128xf32>
    %31 = arith.mulf %28, %28 : vector<32x128xf32>
    %cst_35 = arith.constant dense<0.000000e+00> : vector<128xf32>
    %32 = vector.multi_reduction <add>, %31, %cst_35 [0] : vector<32x128xf32> to vector<128xf32>
    %33 = vector.shape_cast %32 : vector<128xf32> to vector<1x128xf32>
    %cst_36 = arith.constant dense<0.000000e+00> : vector<1x8xf32>
    %34 = tpu.matmul %30, %5, %cst_36 {dimension_numbers = #tpu.dot_dimension_numbers<[1], [0], [0], [1], [0, 0, 1, 1], [], []>} : vector<1x128xf32>, vector<128x8xf32>, vector<1x8xf32> -> vector<1x8xf32>
    %cst_37 = arith.constant 0.001953125 : f32
    %35 = vector.broadcast %cst_37 : f32 to vector<1x8xf32>
    %36 = arith.mulf %34, %35 : vector<1x8xf32>
    %cst_38 = arith.constant dense<0.000000e+00> : vector<1x8xf32>
    %37 = tpu.matmul %33, %5, %cst_38 {dimension_numbers = #tpu.dot_dimension_numbers<[1], [0], [0], [1], [0, 0, 1, 1], [], []>} : vector<1x128xf32>, vector<128x8xf32>, vector<1x8xf32> -> vector<1x8xf32>
    %cst_39 = arith.constant 0.001953125 : f32
    %38 = vector.broadcast %cst_39 : f32 to vector<1x8xf32>
    %39 = arith.mulf %37, %38 : vector<1x8xf32>
    %40 = arith.mulf %36, %36 : vector<1x8xf32>
    %41 = arith.subf %39, %40 : vector<1x8xf32>
    %c0_40 = arith.constant 0 : index
    %c0_41 = arith.constant 0 : index
    %42 = vector.load %arg3[%c0_40, %c0_41] : memref<1x8xf32, #tpu.memory_space<vmem>>, vector<1x8xf32>
    %cst_42 = arith.constant 9.99999974E-6 : f32
    %43 = vector.broadcast %cst_42 : f32 to vector<1x8xf32>
    %44 = arith.addf %41, %43 : vector<1x8xf32>
    %45 = math.rsqrt %44 : vector<1x8xf32>
    %46 = arith.mulf %42, %45 : vector<1x8xf32>
    %c0_43 = arith.constant 0 : index
    %c0_44 = arith.constant 0 : index
    %47 = vector.load %arg4[%c0_43, %c0_44] : memref<1x8xf32, #tpu.memory_space<vmem>>, vector<1x8xf32>
    %48 = arith.mulf %36, %46 : vector<1x8xf32>
    %49 = arith.subf %47, %48 : vector<1x8xf32>
    %cst_45 = arith.constant dense<0.000000e+00> : vector<1x128xf32>
    %50 = tpu.matmul %46, %6, %cst_45 {dimension_numbers = #tpu.dot_dimension_numbers<[1], [0], [0], [1], [0, 0, 1, 1], [], []>} : vector<1x8xf32>, vector<8x128xf32>, vector<1x128xf32> -> vector<1x128xf32>
    %cst_46 = arith.constant dense<0.000000e+00> : vector<1x128xf32>
    %51 = tpu.matmul %49, %6, %cst_46 {dimension_numbers = #tpu.dot_dimension_numbers<[1], [0], [0], [1], [0, 0, 1, 1], [], []>} : vector<1x8xf32>, vector<8x128xf32>, vector<1x128xf32> -> vector<1x128xf32>
    %52 = vector.broadcast %50 : vector<1x128xf32> to vector<32x128xf32>
    %53 = arith.mulf %28, %52 : vector<32x128xf32>
    %54 = vector.broadcast %51 : vector<1x128xf32> to vector<32x128xf32>
    %55 = arith.addf %53, %54 : vector<32x128xf32>
    %cst_47 = arith.constant 0.000000e+00 : f32
    %56 = vector.broadcast %cst_47 : f32 to vector<32x128xf32>
    %57 = arith.maximumf %55, %56 : vector<32x128xf32>
    %c0_48 = arith.constant 0 : index
    %c0_49 = arith.constant 0 : index
    %c0_50 = arith.constant 0 : index
    %58 = vector.load %arg11[%c0_48, %c0_49, %c0_50] : memref<2x18x128xf32, #tpu.memory_space<vmem>>, vector<2x1x128xf32>
    tpu.vector_store %arg11[%c0_48, %c0_49, %c0_50], %0 {strides = array<i32>} : memref<2x18x128xf32, #tpu.memory_space<vmem>>, vector<2x1x128xf32>,
    %c0_51 = arith.constant 0 : index
    %c17_52 = arith.constant 17 : index
    %c0_53 = arith.constant 0 : index
    %59 = vector.load %arg11[%c0_51, %c17_52, %c0_53] : memref<2x18x128xf32, #tpu.memory_space<vmem>>, vector<2x1x128xf32>
    tpu.vector_store %arg11[%c0_51, %c17_52, %c0_53], %0 {strides = array<i32>} : memref<2x18x128xf32, #tpu.memory_space<vmem>>, vector<2x1x128xf32>,
    %60 = vector.shape_cast %57 : vector<32x128xf32> to vector<2x16x128xf32>
    %c0_54 = arith.constant 0 : index
    %c1_55 = arith.constant 1 : index
    %c0_56 = arith.constant 0 : index
    %61 = vector.load %arg11[%c0_54, %c1_55, %c0_56] : memref<2x18x128xf32, #tpu.memory_space<vmem>>, vector<2x16x128xf32>
    tpu.vector_store %arg11[%c0_54, %c1_55, %c0_56], %60 {strides = array<i32>} : memref<2x18x128xf32, #tpu.memory_space<vmem>>, vector<2x16x128xf32>,
    %cst_57 = arith.constant 0.000000e+00 : f32
    %62 = vector.broadcast %cst_57 : f32 to vector<32x128xf32>
    %c0_58 = arith.constant 0 : index
    %c0_59 = arith.constant 0 : index
    %c0_60 = arith.constant 0 : index
    %63 = vector.load %arg11[%c0_58, %c0_59, %c0_60] : memref<2x18x128xf32, #tpu.memory_space<vmem>>, vector<2x16x128xf32>
    %64 = vector.shape_cast %63 : vector<2x16x128xf32> to vector<32x128xf32>
    %65 = arith.truncf %64 : vector<32x128xf32> to vector<32x128xbf16>
    %c0_61 = arith.constant 0 : index
    %c0_62 = arith.constant 0 : index
    %c0_63 = arith.constant 0 : index
    %66 = vector.load %arg2[%c0_61, %c0_62, %c0_63] : memref<3x128x128xbf16, #tpu.memory_space<vmem>>, vector<1x128x128xbf16>
    %67 = vector.shape_cast %66 : vector<1x128x128xbf16> to vector<128x128xbf16>
    %cst_64 = arith.constant dense<0.000000e+00> : vector<32x128xf32>
    %68 = tpu.matmul %65, %67, %cst_64 {dimension_numbers = #tpu.dot_dimension_numbers<[1], [0], [0], [1], [0, 0, 1, 1], [], []>} : vector<32x128xbf16>, vector<128x128xbf16>, vector<32x128xf32> -> vector<32x128xf32>
    %69 = arith.addf %62, %68 : vector<32x128xf32>
    %c0_65 = arith.constant 0 : index
    %c1_66 = arith.constant 1 : index
    %c0_67 = arith.constant 0 : index
    %70 = vector.load %arg11[%c0_65, %c1_66, %c0_67] : memref<2x18x128xf32, #tpu.memory_space<vmem>>, vector<2x16x128xf32>
    %71 = vector.shape_cast %70 : vector<2x16x128xf32> to vector<32x128xf32>
    %72 = arith.truncf %71 : vector<32x128xf32> to vector<32x128xbf16>
    %c1_68 = arith.constant 1 : index
    %c0_69 = arith.constant 0 : index
    %c0_70 = arith.constant 0 : index
    %73 = vector.load %arg2[%c1_68, %c0_69, %c0_70] : memref<3x128x128xbf16, #tpu.memory_space<vmem>>, vector<1x128x128xbf16>
    %74 = vector.shape_cast %73 : vector<1x128x128xbf16> to vector<128x128xbf16>
    %cst_71 = arith.constant dense<0.000000e+00> : vector<32x128xf32>
    %75 = tpu.matmul %72, %74, %cst_71 {dimension_numbers = #tpu.dot_dimension_numbers<[1], [0], [0], [1], [0, 0, 1, 1], [], []>} : vector<32x128xbf16>, vector<128x128xbf16>, vector<32x128xf32> -> vector<32x128xf32>
    %76 = arith.addf %69, %75 : vector<32x128xf32>
    %c0_72 = arith.constant 0 : index
    %c2_73 = arith.constant 2 : index
    %c0_74 = arith.constant 0 : index
    %77 = vector.load %arg11[%c0_72, %c2_73, %c0_74] : memref<2x18x128xf32, #tpu.memory_space<vmem>>, vector<2x16x128xf32>
    %78 = vector.shape_cast %77 : vector<2x16x128xf32> to vector<32x128xf32>
    %79 = arith.truncf %78 : vector<32x128xf32> to vector<32x128xbf16>
    %c2_75 = arith.constant 2 : index
    %c0_76 = arith.constant 0 : index
    %c0_77 = arith.constant 0 : index
    %80 = vector.load %arg2[%c2_75, %c0_76, %c0_77] : memref<3x128x128xbf16, #tpu.memory_space<vmem>>, vector<1x128x128xbf16>
    %81 = vector.shape_cast %80 : vector<1x128x128xbf16> to vector<128x128xbf16>
    %cst_78 = arith.constant dense<0.000000e+00> : vector<32x128xf32>
    %82 = tpu.matmul %79, %81, %cst_78 {dimension_numbers = #tpu.dot_dimension_numbers<[1], [0], [0], [1], [0, 0, 1, 1], [], []>} : vector<32x128xbf16>, vector<128x128xbf16>, vector<32x128xf32> -> vector<32x128xf32>
    %83 = arith.addf %76, %82 : vector<32x128xf32>
    %cst_79 = arith.constant dense<0.000000e+00> : vector<128xf32>
    %84 = vector.multi_reduction <add>, %83, %cst_79 [0] : vector<32x128xf32> to vector<128xf32>
    %85 = vector.shape_cast %84 : vector<128xf32> to vector<1x128xf32>
    %86 = arith.mulf %83, %83 : vector<32x128xf32>
    %cst_80 = arith.constant dense<0.000000e+00> : vector<128xf32>
    %87 = vector.multi_reduction <add>, %86, %cst_80 [0] : vector<32x128xf32> to vector<128xf32>
    %88 = vector.shape_cast %87 : vector<128xf32> to vector<1x128xf32>
    %cst_81 = arith.constant dense<0.000000e+00> : vector<1x8xf32>
    %89 = tpu.matmul %85, %5, %cst_81 {dimension_numbers = #tpu.dot_dimension_numbers<[1], [0], [0], [1], [0, 0, 1, 1], [], []>} : vector<1x128xf32>, vector<128x8xf32>, vector<1x8xf32> -> vector<1x8xf32>
    %cst_82 = arith.constant 0.001953125 : f32
    %90 = vector.broadcast %cst_82 : f32 to vector<1x8xf32>
    %91 = arith.mulf %89, %90 : vector<1x8xf32>
    %cst_83 = arith.constant dense<0.000000e+00> : vector<1x8xf32>
    %92 = tpu.matmul %88, %5, %cst_83 {dimension_numbers = #tpu.dot_dimension_numbers<[1], [0], [0], [1], [0, 0, 1, 1], [], []>} : vector<1x128xf32>, vector<128x8xf32>, vector<1x8xf32> -> vector<1x8xf32>
    %cst_84 = arith.constant 0.001953125 : f32
    %93 = vector.broadcast %cst_84 : f32 to vector<1x8xf32>
    %94 = arith.mulf %92, %93 : vector<1x8xf32>
    %95 = arith.mulf %91, %91 : vector<1x8xf32>
    %96 = arith.subf %94, %95 : vector<1x8xf32>
    %c0_85 = arith.constant 0 : index
    %c0_86 = arith.constant 0 : index
    %97 = vector.load %arg5[%c0_85, %c0_86] : memref<1x8xf32, #tpu.memory_space<vmem>>, vector<1x8xf32>
    %cst_87 = arith.constant 9.99999974E-6 : f32
    %98 = vector.broadcast %cst_87 : f32 to vector<1x8xf32>
    %99 = arith.addf %96, %98 : vector<1x8xf32>
    %100 = math.rsqrt %99 : vector<1x8xf32>
    %101 = arith.mulf %97, %100 : vector<1x8xf32>
    %c0_88 = arith.constant 0 : index
    %c0_89 = arith.constant 0 : index
    %102 = vector.load %arg6[%c0_88, %c0_89] : memref<1x8xf32, #tpu.memory_space<vmem>>, vector<1x8xf32>
    %103 = arith.mulf %91, %101 : vector<1x8xf32>
    %104 = arith.subf %102, %103 : vector<1x8xf32>
    %cst_90 = arith.constant dense<0.000000e+00> : vector<1x128xf32>
    %105 = tpu.matmul %101, %6, %cst_90 {dimension_numbers = #tpu.dot_dimension_numbers<[1], [0], [0], [1], [0, 0, 1, 1], [], []>} : vector<1x8xf32>, vector<8x128xf32>, vector<1x128xf32> -> vector<1x128xf32>
    %cst_91 = arith.constant dense<0.000000e+00> : vector<1x128xf32>
    %106 = tpu.matmul %104, %6, %cst_91 {dimension_numbers = #tpu.dot_dimension_numbers<[1], [0], [0], [1], [0, 0, 1, 1], [], []>} : vector<1x8xf32>, vector<8x128xf32>, vector<1x128xf32> -> vector<1x128xf32>
    %107 = vector.broadcast %105 : vector<1x128xf32> to vector<32x128xf32>
    %108 = arith.mulf %83, %107 : vector<32x128xf32>
    %109 = vector.broadcast %106 : vector<1x128xf32> to vector<32x128xf32>
    %110 = arith.addf %108, %109 : vector<32x128xf32>
    %c0_92 = arith.constant 0 : index
    %c0_93 = arith.constant 0 : index
    %c0_94 = arith.constant 0 : index
    %111 = vector.load %arg0[%c0_92, %c0_93, %c0_94] : memref<2x16x128xf32, #tpu.memory_space<vmem>>, vector<2x16x128xf32>
    %112 = vector.shape_cast %111 : vector<2x16x128xf32> to vector<32x128xf32>
    %113 = arith.addf %112, %110 : vector<32x128xf32>
    %c0_95 = arith.constant 0 : index
    %c0_96 = arith.constant 0 : index
    %114 = vector.load %arg9[%c0_95, %c0_96] : memref<32x128xf32, #tpu.memory_space<vmem>>, vector<32x128xf32>
    tpu.vector_store %arg9[%c0_95, %c0_96], %113 {strides = array<i32>} : memref<32x128xf32, #tpu.memory_space<vmem>>, vector<32x128xf32>,
    return
  }
}

</mosaic_0001>

<llo_original>
// kernel: b_block.1
$region0: #{b_block.1}
  #allocation0 [shape = 'u32[]', space=smem, size = 0x4, offset = 0x4, fixed_abs, tag = 'smem constant byte address 0x4 - core index']
  #allocation1 [shape = 'u32[144,128]{1,0:T(1,128)}', space=vmem, size = 0x12000, scoped, tag = 'internal scratch']
  #allocation2 [shape = 'f32[2,18,128]{2,1,0:T(8,128)}', space=vmem, size = 0x6000, scoped, tag = 'scratch operand']
  #allocation3 [shape = 'f32[2,18,128]{2,1,0:T(8,128)}', space=vmem, size = 0x6000, scoped, tag = 'scratch operand']
  %s0 = inlined_call_operand.vmem [shape: f32[2,16,128], index: 0, kind: input, shape index: {}]
  %s1 = inlined_call_operand.vmem [shape: bf16[3,128,128], index: 1, kind: input, shape index: {}]
  %s2 = inlined_call_operand.vmem [shape: bf16[3,128,128], index: 2, kind: input, shape index: {}]
  %s3 = inlined_call_operand.vmem [shape: f32[1,8], index: 3, kind: input, shape index: {}]
  %s4 = inlined_call_operand.vmem [shape: f32[1,8], index: 4, kind: input, shape index: {}]
  %s5 = inlined_call_operand.vmem [shape: f32[1,8], index: 5, kind: input, shape index: {}]
  %s6 = inlined_call_operand.vmem [shape: f32[1,8], index: 6, kind: input, shape index: {}]
  %s7 = inlined_call_operand.vmem [shape: f32[128,8], index: 7, kind: input, shape index: {}]
  %s8 = inlined_call_operand.vmem [shape: f32[8,128], index: 8, kind: input, shape index: {}]
  %s9 = inlined_call_operand.vmem [shape: f32[32,128], index: 9, kind: output, shape index: {}]
  %s10 = sld [smem:[#allocation0]]
  $region46: #{b_block.1} parent=0
    _
  %s12 = ssub.s32 1, %s10
  %s13 = scalar_select 0, %s12, %s10
  // Predicated region
  $region2: #{b_block.1} parent=0 // pred_check
    _
  $region3: #{b_block.1} parent=0 // pred_check_branch
    %15 = sbr.rel (0) target = $region5
  $region4: #{b_block.1} parent=0 // pred_region
    _
  $region5: #{b_block.1} parent=0 // pred_fallthru
    _
  // Predicated region
  $region6: #{b_block.1} parent=0 // pred_check
    _
  $region7: #{b_block.1} parent=0 // pred_check_branch
    %17 = sbr.rel (0) target = $region9
  $region8: #{b_block.1} parent=0 // pred_region
    _
  $region9: #{b_block.1} parent=0 // pred_fallthru
    _
  // Predicated region
  $region10: #{b_block.1} parent=0 // pred_check
    _
  $region11: #{b_block.1} parent=0 // pred_check_branch
    %19 = sbr.rel (0) target = $region13
  $region12: #{b_block.1} parent=0 // pred_region
    _
  $region13: #{b_block.1} parent=0 // pred_fallthru
    _
  // Predicated region
  $region14: #{b_block.1} parent=0 // pred_check
    _
  $region15: #{b_block.1} parent=0 // pred_check_branch
    %21 = sbr.rel (0) target = $region17
  $region16: #{b_block.1} parent=0 // pred_region
    _
  $region17: #{b_block.1} parent=0 // pred_fallthru
    _
  // Predicated region
  $region18: #{b_block.1} parent=0 // pred_check
    _
  $region19: #{b_block.1} parent=0 // pred_check_branch
    %23 = sbr.rel (0) target = $region21
  $region20: #{b_block.1} parent=0 // pred_region
    _
  $region21: #{b_block.1} parent=0 // pred_fallthru
    _
  // Predicated region
  $region22: #{b_block.1} parent=0 // pred_check
    _
  $region23: #{b_block.1} parent=0 // pred_check_branch
    %25 = sbr.rel (0) target = $region25
  $region24: #{b_block.1} parent=0 // pred_region
    _
  $region25: #{b_block.1} parent=0 // pred_fallthru
    _
  // Predicated region
  $region26: #{b_block.1} parent=0 // pred_check
    _
  $region27: #{b_block.1} parent=0 // pred_check_branch
    %27 = sbr.rel (0) target = $region29
  $region28: #{b_block.1} parent=0 // pred_region
    _
  $region29: #{b_block.1} parent=0 // pred_fallthru
    _
  // Predicated region
  $region30: #{b_block.1} parent=0 // pred_check
    _
  $region31: #{b_block.1} parent=0 // pred_check_branch
    %29 = sbr.rel (0) target = $region33
  $region32: #{b_block.1} parent=0 // pred_region
    _
  $region33: #{b_block.1} parent=0 // pred_fallthru
    _
  // Predicated region
  $region34: #{b_block.1} parent=0 // pred_check
    _
  $region35: #{b_block.1} parent=0 // pred_check_branch
    %31 = sbr.rel (0) target = $region37
  $region36: #{b_block.1} parent=0 // pred_region
    _
  $region37: #{b_block.1} parent=0 // pred_fallthru
    _
  %33 = vst [vmem:[#allocation2] sm:$0x1] 0.0
  %34 = vst [vmem:[#allocation2 + $0x18] sm:$0x1] 0.0
  %35 = vst [vmem:[#allocation2 + $0x11] sm:$0x1] 0.0
  %36 = vst [vmem:[#allocation2 + $0x29] sm:$0x1] 0.0
  %v37 = vld [vmem:[%s0] sm:$0xff]
  %v38 = vld [vmem:[%s0 + $0x8] sm:$0xff]
  %v39 = vld [vmem:[%s0 + $0x10] sm:$0xff]
  %v40 = vld [vmem:[%s0 + $0x18] sm:$0xff]
  %41 = vst [vmem:[#allocation2 + $0x1] sm:$0xff] %v37
  %42 = vst [vmem:[#allocation2 + $0x9] sm:$0xff] %v38
  %43 = vst [vmem:[#allocation2 + $0x19] sm:$0xff] %v39
  %44 = vst [vmem:[#allocation2 + $0x21] sm:$0xff] %v40
  %v45 = vld [vmem:[%s7] sm:$0xff]
  %v46 = vld [vmem:[%s7 + $0x8] sm:$0xff]
  %v47 = vld [vmem:[%s7 + $0x10] sm:$0xff]
  %v48 = vld [vmem:[%s7 + $0x18] sm:$0xff]
  %v49 = vld [vmem:[%s7 + $0x20] sm:$0xff]
  %v50 = vld [vmem:[%s7 + $0x28] sm:$0xff]
  %v51 = vld [vmem:[%s7 + $0x30] sm:$0xff]
  %v52 = vld [vmem:[%s7 + $0x38] sm:$0xff]
  %v53 = vld [vmem:[%s7 + $0x40] sm:$0xff]
  %v54 = vld [vmem:[%s7 + $0x48] sm:$0xff]
  %v55 = vld [vmem:[%s7 + $0x50] sm:$0xff]
  %v56 = vld [vmem:[%s7 + $0x58] sm:$0xff]
  %v57 = vld [vmem:[%s7 + $0x60] sm:$0xff]
  %v58 = vld [vmem:[%s7 + $0x68] sm:$0xff]
  %v59 = vld [vmem:[%s7 + $0x70] sm:$0xff]
  %v60 = vld [vmem:[%s7 + $0x78] sm:$0xff]
  %v61 = vld [vmem:[%s8] sm:$0xff]
  %v62 = vld [vmem:[#allocation2] sm:$0xff]
  %v63 = vld [vmem:[#allocation2 + $0x8] sm:$0xff]
  %v64 = vld [vmem:[#allocation2 + $0x18] sm:$0xff]
  %v65 = vld [vmem:[#allocation2 + $0x20] sm:$0xff]
  %v66 = vpack.c.bf16 %v63, %v62
  %v67 = vpack.c.bf16 %v65, %v64
  %v68 = vld [vmem:[%s1] sm:$0xf]
  %v69 = vld [vmem:[%s1 + $0x4] sm:$0xf]
  %v70 = vld [vmem:[%s1 + $0x8] sm:$0xf]
  %v71 = vld [vmem:[%s1 + $0xc] sm:$0xf]
  %v72 = vld [vmem:[%s1 + $0x10] sm:$0xf]
  %v73 = vld [vmem:[%s1 + $0x14] sm:$0xf]
  %v74 = vld [vmem:[%s1 + $0x18] sm:$0xf]
  %v75 = vld [vmem:[%s1 + $0x1c] sm:$0xf]
  %v76 = vld [vmem:[%s1 + $0x20] sm:$0xf]
  %v77 = vld [vmem:[%s1 + $0x24] sm:$0xf]
  %v78 = vld [vmem:[%s1 + $0x28] sm:$0xf]
  %v79 = vld [vmem:[%s1 + $0x2c] sm:$0xf]
  %v80 = vld [vmem:[%s1 + $0x30] sm:$0xf]
  %v81 = vld [vmem:[%s1 + $0x34] sm:$0xf]
  %v82 = vld [vmem:[%s1 + $0x38] sm:$0xf]
  %v83 = vld [vmem:[%s1 + $0x3c] sm:$0xf]
  %v84 = vld [vmem:[#allocation2 + $0x1] sm:$0xff]
  %v85 = vld [vmem:[#allocation2 + $0x9] sm:$0xff]
  %v86 = vld [vmem:[#allocation2 + $0x19] sm:$0xff]
  %v87 = vld [vmem:[#allocation2 + $0x21] sm:$0xff]
  %v88 = vpack.c.bf16 %v85, %v84
  %v89 = vpack.c.bf16 %v87, %v86
  %s90 = scalar_lea.vmem %s1, 64
  %v91 = vld [vmem:[%s90] sm:$0xf]
  %v92 = vld [vmem:[%s90 + $0x4] sm:$0xf]
  %v93 = vld [vmem:[%s90 + $0x8] sm:$0xf]
  %v94 = vld [vmem:[%s90 + $0xc] sm:$0xf]
  %v95 = vld [vmem:[%s90 + $0x10] sm:$0xf]
  %v96 = vld [vmem:[%s90 + $0x14] sm:$0xf]
  %v97 = vld [vmem:[%s90 + $0x18] sm:$0xf]
  %v98 = vld [vmem:[%s90 + $0x1c] sm:$0xf]
  %v99 = vld [vmem:[%s90 + $0x20] sm:$0xf]
  %v100 = vld [vmem:[%s90 + $0x24] sm:$0xf]
  %v101 = vld [vmem:[%s90 + $0x28] sm:$0xf]
  %v102 = vld [vmem:[%s90 + $0x2c] sm:$0xf]
  %v103 = vld [vmem:[%s90 + $0x30] sm:$0xf]
  %v104 = vld [vmem:[%s90 + $0x34] sm:$0xf]
  %v105 = vld [vmem:[%s90 + $0x38] sm:$0xf]
  %v106 = vld [vmem:[%s90 + $0x3c] sm:$0xf]
  %v123 = vunpack.c.l.b16 %v91
  %v124 = vunpack.c.l.b16 %v92
  %v125 = vunpack.c.l.b16 %v93
  %v126 = vunpack.c.l.b16 %v94
  %v127 = vunpack.c.l.b16 %v95
  %v128 = vunpack.c.l.b16 %v96
  %v129 = vunpack.c.l.b16 %v97
  %v130 = vunpack.c.l.b16 %v98
  %v131 = vunpack.c.l.b16 %v99
  %v132 = vunpack.c.l.b16 %v100
  %v133 = vunpack.c.l.b16 %v101
  %v134 = vunpack.c.l.b16 %v102
  %v135 = vunpack.c.l.b16 %v103
  %v136 = vunpack.c.l.b16 %v104
  %v137 = vunpack.c.l.b16 %v105
  %v138 = vunpack.c.l.b16 %v106
  %v139 = vpack.c.b16 %v124, %v123
  %v140 = vpack.c.b16 %v126, %v125
  %v141 = vpack.c.b16 %v128, %v127
  %v142 = vpack.c.b16 %v130, %v129
  %v143 = vpack.c.b16 %v132, %v131
  %v144 = vpack.c.b16 %v134, %v133
  %v145 = vpack.c.b16 %v136, %v135
  %v146 = vpack.c.b16 %v138, %v137
  %155 = vmatprep.subr.bf16.mxu0 0
  %156 = vmatpush1.bf16.msra.mxu0 %v146
  %157 = vmatprep.subr.bf16.mxu0 0
  %158 = vmatpush1.bf16.msra.mxu0 %v145
  %159 = vmatprep.subr.bf16.mxu0 0
  %160 = vmatpush1.bf16.msra.mxu0 %v144
  %161 = vmatprep.subr.bf16.mxu0 0
  %162 = vmatpush1.bf16.msra.mxu0 %v143
  %163 = vmatprep.subr.bf16.mxu0 0
  %164 = vmatpush1.bf16.msra.mxu0 %v142
  %165 = vmatprep.subr.bf16.mxu0 0
  %166 = vmatpush1.bf16.msra.mxu0 %v141
  %167 = vmatprep.subr.bf16.mxu0 0
  %168 = vmatpush1.bf16.msra.mxu0 %v140
  %169 = vmatprep.subr.bf16.mxu0 0
  %170 = vmatpush1.bf16.msra.mxu0 %v139
  %171 = vmatprep.subr.bf16.mxu0 0
  %172 = vmatpush2.bf16.msra.mxu0 0
  %173 = vmatprep.subr.bf16.mxu0 0
  %174 = vmatpush2.bf16.msra.mxu0 0
  %175 = vmatprep.subr.bf16.mxu0 0
  %176 = vmatpush2.bf16.msra.mxu0 0
  %177 = vmatprep.subr.bf16.mxu0 0
  %178 = vmatpush2.bf16.msra.mxu0 0
  %179 = vmatprep.subr.bf16.mxu0 0
  %180 = vmatpush2.bf16.msra.mxu0 0
  %181 = vmatprep.subr.bf16.mxu0 0
  %182 = vmatpush2.bf16.msra.mxu0 0
  %183 = vmatprep.subr.bf16.mxu0 0
  %184 = vmatpush2.bf16.msra.mxu0 0
  %185 = vmatprep.subr.bf16.mxu0 0
  %186 = vmatpush2.bf16.msra.mxu0 0
  %187 = vmatprep.mubr.bf16.mxu0 0
  %188 = vmatmul.mubr.bf16.gmra.mxu0 %v88
  %v189 = vpop.f32.mrf.mxu0
  %v190 = vadd.f32 0.0, %v189
  %v191 = vpop.f32.mrf.mxu0
  %v192 = vpop.f32.mrf.mxu0
  %v193 = vadd.f32 0.0, %v192
  %v194 = vpop.f32.mrf.mxu0
  %195 = vmatprep.mubr.bf16.mxu0 0
  %196 = vmatmul.mubr.bf16.gmra.mxu0 %v89
  %v197 = vpop.f32.mrf.mxu0
  %v198 = vadd.f32 0.0, %v197
  %v199 = vpop.f32.mrf.mxu0
  %v200 = vpop.f32.mrf.mxu0
  %v201 = vadd.f32 0.0, %v200
  %v202 = vpop.f32.mrf.mxu0
  %203 = vdwg.mxu0
  %v220 = vunpack.c.l.b16 %v68
  %v221 = vunpack.c.l.b16 %v69
  %v222 = vunpack.c.l.b16 %v70
  %v223 = vunpack.c.l.b16 %v71
  %v224 = vunpack.c.l.b16 %v72
  %v225 = vunpack.c.l.b16 %v73
  %v226 = vunpack.c.l.b16 %v74
  %v227 = vunpack.c.l.b16 %v75
  %v228 = vunpack.c.l.b16 %v76
  %v229 = vunpack.c.l.b16 %v77
  %v230 = vunpack.c.l.b16 %v78
  %v231 = vunpack.c.l.b16 %v79
  %v232 = vunpack.c.l.b16 %v80
  %v233 = vunpack.c.l.b16 %v81
  %v234 = vunpack.c.l.b16 %v82
  %v235 = vunpack.c.l.b16 %v83
  %v236 = vpack.c.b16 %v221, %v220
  %v237 = vpack.c.b16 %v223, %v222
  %v238 = vpack.c.b16 %v225, %v224
  %v239 = vpack.c.b16 %v227, %v226
  %v240 = vpack.c.b16 %v229, %v228
  %v241 = vpack.c.b16 %v231, %v230
  %v242 = vpack.c.b16 %v233, %v232
  %v243 = vpack.c.b16 %v235, %v234
  %252 = vmatprep.subr.bf16.mxu0 0
  %253 = vmatpush1.bf16.msra.mxu0 %v243
  %254 = vmatprep.subr.bf16.mxu0 0
  %255 = vmatpush1.bf16.msra.mxu0 %v242
  %256 = vmatprep.subr.bf16.mxu0 0
  %257 = vmatpush1.bf16.msra.mxu0 %v241
  %258 = vmatprep.subr.bf16.mxu0 0
  %259 = vmatpush1.bf16.msra.mxu0 %v240
  %260 = vmatprep.subr.bf16.mxu0 0
  %261 = vmatpush1.bf16.msra.mxu0 %v239
  %262 = vmatprep.subr.bf16.mxu0 0
  %263 = vmatpush1.bf16.msra.mxu0 %v238
  %264 = vmatprep.subr.bf16.mxu0 0
  %265 = vmatpush1.bf16.msra.mxu0 %v237
  %266 = vmatprep.subr.bf16.mxu0 0
  %267 = vmatpush1.bf16.msra.mxu0 %v236
  %268 = vmatprep.subr.bf16.mxu0 0
  %269 = vmatpush2.bf16.msra.mxu0 0
  %270 = vmatprep.subr.bf16.mxu0 0
  %271 = vmatpush2.bf16.msra.mxu0 0
  %272 = vmatprep.subr.bf16.mxu0 0
  %273 = vmatpush2.bf16.msra.mxu0 0
  %274 = vmatprep.subr.bf16.mxu0 0
  %275 = vmatpush2.bf16.msra.mxu0 0
  %276 = vmatprep.subr.bf16.mxu0 0
  %277 = vmatpush2.bf16.msra.mxu0 0
  %278 = vmatprep.subr.bf16.mxu0 0
  %279 = vmatpush2.bf16.msra.mxu0 0
  %280 = vmatprep.subr.bf16.mxu0 0
  %281 = vmatpush2.bf16.msra.mxu0 0
  %282 = vmatprep.subr.bf16.mxu0 0
  %283 = vmatpush2.bf16.msra.mxu0 0
  %284 = vmatprep.mubr.bf16.mxu0 0
  %285 = vmatmul.mubr.bf16.gmra.mxu0 %v66
  %v286 = vpop.f32.mrf.mxu0
  %v287 = vadd.f32 %v190, %v286
  %v288 = vpop.f32.mrf.mxu0
  %v289 = vpop.f32.mrf.mxu0
  %v290 = vadd.f32 %v193, %v289
  %v291 = vpop.f32.mrf.mxu0
  %292 = vmatprep.mubr.bf16.mxu0 0
  %293 = vmatmul.mubr.bf16.gmra.mxu0 %v67
  %v294 = vpop.f32.mrf.mxu0
  %v295 = vadd.f32 %v198, %v294
  %v296 = vpop.f32.mrf.mxu0
  %v297 = vpop.f32.mrf.mxu0
  %v298 = vadd.f32 %v201, %v297
  %v299 = vpop.f32.mrf.mxu0
  %300 = vdwg.mxu0
  %v301 = vld [vmem:[#allocation2 + $0x2] sm:$0xff]
  %v302 = vld [vmem:[#allocation2 + $0xa] sm:$0xff]
  %v303 = vld [vmem:[#allocation2 + $0x1a] sm:$0xff]
  %v304 = vld [vmem:[#allocation2 + $0x22] sm:$0xff]
  %v305 = vpack.c.bf16 %v302, %v301
  %v306 = vpack.c.bf16 %v304, %v303
  %s307 = scalar_lea.vmem %s1, 128
  %v308 = vld [vmem:[%s307] sm:$0xf]
  %v309 = vld [vmem:[%s307 + $0x4] sm:$0xf]
  %v310 = vld [vmem:[%s307 + $0x8] sm:$0xf]
  %v311 = vld [vmem:[%s307 + $0xc] sm:$0xf]
  %v312 = vld [vmem:[%s307 + $0x10] sm:$0xf]
  %v313 = vld [vmem:[%s307 + $0x14] sm:$0xf]
  %v314 = vld [vmem:[%s307 + $0x18] sm:$0xf]
  %v315 = vld [vmem:[%s307 + $0x1c] sm:$0xf]
  %v316 = vld [vmem:[%s307 + $0x20] sm:$0xf]
  %v317 = vld [vmem:[%s307 + $0x24] sm:$0xf]
  %v318 = vld [vmem:[%s307 + $0x28] sm:$0xf]
  %v319 = vld [vmem:[%s307 + $0x2c] sm:$0xf]
  %v320 = vld [vmem:[%s307 + $0x30] sm:$0xf]
  %v321 = vld [vmem:[%s307 + $0x34] sm:$0xf]
  %v322 = vld [vmem:[%s307 + $0x38] sm:$0xf]
  %v323 = vld [vmem:[%s307 + $0x3c] sm:$0xf]
  %v340 = vunpack.c.l.b16 %v308
  %v341 = vunpack.c.l.b16 %v309
  %v342 = vunpack.c.l.b16 %v310
  %v343 = vunpack.c.l.b16 %v311
  %v344 = vunpack.c.l.b16 %v312
  %v345 = vunpack.c.l.b16 %v313
  %v346 = vunpack.c.l.b16 %v314
  %v347 = vunpack.c.l.b16 %v315
  %v348 = vunpack.c.l.b16 %v316
  %v349 = vunpack.c.l.b16 %v317
  %v350 = vunpack.c.l.b16 %v318
  %v351 = vunpack.c.l.b16 %v319
  %v352 = vunpack.c.l.b16 %v320
  %v353 = vunpack.c.l.b16 %v321
  %v354 = vunpack.c.l.b16 %v322
  %v355 = vunpack.c.l.b16 %v323
  %v356 = vpack.c.b16 %v341, %v340
  %v357 = vpack.c.b16 %v343, %v342
  %v358 = vpack.c.b16 %v345, %v344
  %v359 = vpack.c.b16 %v347, %v346
  %v360 = vpack.c.b16 %v349, %v348
  %v361 = vpack.c.b16 %v351, %v350
  %v362 = vpack.c.b16 %v353, %v352
  %v363 = vpack.c.b16 %v355, %v354
  %372 = vmatprep.subr.bf16.mxu0 0
  %373 = vmatpush1.bf16.msra.mxu0 %v363
  %374 = vmatprep.subr.bf16.mxu0 0
  %375 = vmatpush1.bf16.msra.mxu0 %v362
  %376 = vmatprep.subr.bf16.mxu0 0
  %377 = vmatpush1.bf16.msra.mxu0 %v361
  %378 = vmatprep.subr.bf16.mxu0 0
  %379 = vmatpush1.bf16.msra.mxu0 %v360
  %380 = vmatprep.subr.bf16.mxu0 0
  %381 = vmatpush1.bf16.msra.mxu0 %v359
  %382 = vmatprep.subr.bf16.mxu0 0
  %383 = vmatpush1.bf16.msra.mxu0 %v358
  %384 = vmatprep.subr.bf16.mxu0 0
  %385 = vmatpush1.bf16.msra.mxu0 %v357
  %386 = vmatprep.subr.bf16.mxu0 0
  %387 = vmatpush1.bf16.msra.mxu0 %v356
  %388 = vmatprep.subr.bf16.mxu0 0
  %389 = vmatpush2.bf16.msra.mxu0 0
  %390 = vmatprep.subr.bf16.mxu0 0
  %391 = vmatpush2.bf16.msra.mxu0 0
  %392 = vmatprep.subr.bf16.mxu0 0
  %393 = vmatpush2.bf16.msra.mxu0 0
  %394 = vmatprep.subr.bf16.mxu0 0
  %395 = vmatpush2.bf16.msra.mxu0 0
  %396 = vmatprep.subr.bf16.mxu0 0
  %397 = vmatpush2.bf16.msra.mxu0 0
  %398 = vmatprep.subr.bf16.mxu0 0
  %399 = vmatpush2.bf16.msra.mxu0 0
  %400 = vmatprep.subr.bf16.mxu0 0
  %401 = vmatpush2.bf16.msra.mxu0 0
  %402 = vmatprep.subr.bf16.mxu0 0
  %403 = vmatpush2.bf16.msra.mxu0 0
  %404 = vmatprep.mubr.bf16.mxu0 0
  %405 = vmatmul.mubr.bf16.gmra.mxu0 %v305
  %v406 = vpop.f32.mrf.mxu0
  %v407 = vadd.f32 0.0, %v406
  %v408 = vpop.f32.mrf.mxu0
  %v409 = vpop.f32.mrf.mxu0
  %v410 = vadd.f32 0.0, %v409
  %v411 = vpop.f32.mrf.mxu0
  %412 = vmatprep.mubr.bf16.mxu0 0
  %413 = vmatmul.mubr.bf16.gmra.mxu0 %v306
  %v414 = vpop.f32.mrf.mxu0
  %v415 = vadd.f32 0.0, %v414
  %v416 = vpop.f32.mrf.mxu0
  %v417 = vpop.f32.mrf.mxu0
  %v418 = vadd.f32 0.0, %v417
  %v419 = vpop.f32.mrf.mxu0
  %420 = vdwg.mxu0
  %v421 = vadd.f32 %v287, %v407
  %v422 = vadd.f32 %v290, %v410
  %v423 = vadd.f32 %v295, %v415
  %v424 = vadd.f32 %v298, %v418
  %v425 = vadd.f32 %v421, %v422
  %v426 = vadd.f32 %v425, %v423
  %v427 = vadd.f32 %v426, %v424
  %v428 = vrot.slane %v427, 4
  %v429 = vadd.f32 %v427, %v428
  %v430 = vrot.slane %v429, 2
  %v431 = vadd.f32 %v429, %v430
  %v432 = vrot.slane %v431, 1
  %v433 = vadd.f32 %v431, %v432
  %v434 = vmul.f32 %v421, %v421
  %v435 = vmul.f32 %v422, %v422
  %v436 = vmul.f32 %v423, %v423
  %v437 = vmul.f32 %v424, %v424
  %v438 = vadd.f32 %v434, %v435
  %v439 = vadd.f32 %v438, %v436
  %v440 = vadd.f32 %v439, %v437
  %v441 = vrot.slane %v440, 4
  %v442 = vadd.f32 %v440, %v441
  %v443 = vrot.slane %v442, 2
  %v444 = vadd.f32 %v442, %v443
  %v445 = vrot.slane %v444, 1
  %v446 = vadd.f32 %v444, %v445
  %447 = vmatprep.subr.mxu0 0.0
  %448 = vmatpush1.msra.mxu0 %v60
  %449 = vmatprep.subr.mxu0 0.0
  %450 = vmatpush1.msra.mxu0 %v59
  %451 = vmatprep.subr.mxu0 0.0
  %452 = vmatpush1.msra.mxu0 %v58
  %453 = vmatprep.subr.mxu0 0.0
  %454 = vmatpush1.msra.mxu0 %v57
  %455 = vmatprep.subr.mxu0 0.0
  %456 = vmatpush1.msra.mxu0 %v56
  %457 = vmatprep.subr.mxu0 0.0
  %458 = vmatpush1.msra.mxu0 %v55
  %459 = vmatprep.subr.mxu0 0.0
  %460 = vmatpush1.msra.mxu0 %v54
  %461 = vmatprep.subr.mxu0 0.0
  %462 = vmatpush1.msra.mxu0 %v53
  %463 = vmatprep.subr.mxu0 0.0
  %464 = vmatpush1.msra.mxu0 %v52
  %465 = vmatprep.subr.mxu0 0.0
  %466 = vmatpush1.msra.mxu0 %v51
  %467 = vmatprep.subr.mxu0 0.0
  %468 = vmatpush1.msra.mxu0 %v50
  %469 = vmatprep.subr.mxu0 0.0
  %470 = vmatpush1.msra.mxu0 %v49
  %471 = vmatprep.subr.mxu0 0.0
  %472 = vmatpush1.msra.mxu0 %v48
  %473 = vmatprep.subr.mxu0 0.0
  %474 = vmatpush1.msra.mxu0 %v47
  %475 = vmatprep.subr.mxu0 0.0
  %476 = vmatpush1.msra.mxu0 %v46
  %477 = vmatprep.subr.mxu0 0.0
  %478 = vmatpush1.msra.mxu0 %v45
  %479 = vmatprep.subr.mxu0 0.0
  %480 = vmatpush2.msra.mxu0 0.0
  %481 = vmatprep.subr.mxu0 0.0
  %482 = vmatpush2.msra.mxu0 0.0
  %483 = vmatprep.subr.mxu0 0.0
  %484 = vmatpush2.msra.mxu0 0.0
  %485 = vmatprep.subr.mxu0 0.0
  %486 = vmatpush2.msra.mxu0 0.0
  %487 = vmatprep.subr.mxu0 0.0
  %488 = vmatpush2.msra.mxu0 0.0
  %489 = vmatprep.subr.mxu0 0.0
  %490 = vmatpush2.msra.mxu0 0.0
  %491 = vmatprep.subr.mxu0 0.0
  %492 = vmatpush2.msra.mxu0 0.0
  %493 = vmatprep.subr.mxu0 0.0
  %494 = vmatpush2.msra.mxu0 0.0
  %495 = vmatprep.subr.mxu0 0.0
  %496 = vmatpush2.msra.mxu0 0.0
  %497 = vmatprep.subr.mxu0 0.0
  %498 = vmatpush2.msra.mxu0 0.0
  %499 = vmatprep.subr.mxu0 0.0
  %500 = vmatpush2.msra.mxu0 0.0
  %501 = vmatprep.subr.mxu0 0.0
  %502 = vmatpush2.msra.mxu0 0.0
  %503 = vmatprep.subr.mxu0 0.0
  %504 = vmatpush2.msra.mxu0 0.0
  %505 = vmatprep.subr.mxu0 0.0
  %506 = vmatpush2.msra.mxu0 0.0
  %507 = vmatprep.subr.mxu0 0.0
  %508 = vmatpush2.msra.mxu0 0.0
  %509 = vmatprep.subr.mxu0 0.0
  %510 = vmatpush2.msra.mxu0 0.0
  %511 = vmatprep.mubr.f32.mxu0 0.0
  %512 = vmatmul.mubr.f32.gmra.mxu0 %v433
  %v513 = vpop.f32.mrf.mxu0
  %v514 = vadd.f32 0.0, %v513
  %v515 = vpop.f32.mrf.mxu0
  %516 = vdwg.mxu0
  %v517 = vmul.f32 %v514, 0.001953125
  %518 = vmatprep.subr.mxu0 0.0
  %519 = vmatpush1.msra.mxu0 %v60
  %520 = vmatprep.subr.mxu0 0.0
  %521 = vmatpush1.msra.mxu0 %v59
  %522 = vmatprep.subr.mxu0 0.0
  %523 = vmatpush1.msra.mxu0 %v58
  %524 = vmatprep.subr.mxu0 0.0
  %525 = vmatpush1.msra.mxu0 %v57
  %526 = vmatprep.subr.mxu0 0.0
  %527 = vmatpush1.msra.mxu0 %v56
  %528 = vmatprep.subr.mxu0 0.0
  %529 = vmatpush1.msra.mxu0 %v55
  %530 = vmatprep.subr.mxu0 0.0
  %531 = vmatpush1.msra.mxu0 %v54
  %532 = vmatprep.subr.mxu0 0.0
  %533 = vmatpush1.msra.mxu0 %v53
  %534 = vmatprep.subr.mxu0 0.0
  %535 = vmatpush1.msra.mxu0 %v52
  %536 = vmatprep.subr.mxu0 0.0
  %537 = vmatpush1.msra.mxu0 %v51
  %538 = vmatprep.subr.mxu0 0.0
  %539 = vmatpush1.msra.mxu0 %v50
  %540 = vmatprep.subr.mxu0 0.0
  %541 = vmatpush1.msra.mxu0 %v49
  %542 = vmatprep.subr.mxu0 0.0
  %543 = vmatpush1.msra.mxu0 %v48
  %544 = vmatprep.subr.mxu0 0.0
  %545 = vmatpush1.msra.mxu0 %v47
  %546 = vmatprep.subr.mxu0 0.0
  %547 = vmatpush1.msra.mxu0 %v46
  %548 = vmatprep.subr.mxu0 0.0
  %549 = vmatpush1.msra.mxu0 %v45
  %550 = vmatprep.subr.mxu0 0.0
  %551 = vmatpush2.msra.mxu0 0.0
  %552 = vmatprep.subr.mxu0 0.0
  %553 = vmatpush2.msra.mxu0 0.0
  %554 = vmatprep.subr.mxu0 0.0
  %555 = vmatpush2.msra.mxu0 0.0
  %556 = vmatprep.subr.mxu0 0.0
  %557 = vmatpush2.msra.mxu0 0.0
  %558 = vmatprep.subr.mxu0 0.0
  %559 = vmatpush2.msra.mxu0 0.0
  %560 = vmatprep.subr.mxu0 0.0
  %561 = vmatpush2.msra.mxu0 0.0
  %562 = vmatprep.subr.mxu0 0.0
  %563 = vmatpush2.msra.mxu0 0.0
  %564 = vmatprep.subr.mxu0 0.0
  %565 = vmatpush2.msra.mxu0 0.0
  %566 = vmatprep.subr.mxu0 0.0
  %567 = vmatpush2.msra.mxu0 0.0
  %568 = vmatprep.subr.mxu0 0.0
  %569 = vmatpush2.msra.mxu0 0.0
  %570 = vmatprep.subr.mxu0 0.0
  %571 = vmatpush2.msra.mxu0 0.0
  %572 = vmatprep.subr.mxu0 0.0
  %573 = vmatpush2.msra.mxu0 0.0
  %574 = vmatprep.subr.mxu0 0.0
  %575 = vmatpush2.msra.mxu0 0.0
  %576 = vmatprep.subr.mxu0 0.0
  %577 = vmatpush2.msra.mxu0 0.0
  %578 = vmatprep.subr.mxu0 0.0
  %579 = vmatpush2.msra.mxu0 0.0
  %580 = vmatprep.subr.mxu0 0.0
  %581 = vmatpush2.msra.mxu0 0.0
  %582 = vmatprep.mubr.f32.mxu0 0.0
  %583 = vmatmul.mubr.f32.gmra.mxu0 %v446
  %v584 = vpop.f32.mrf.mxu0
  %v585 = vadd.f32 0.0, %v584
  %v586 = vpop.f32.mrf.mxu0
  %587 = vdwg.mxu0
  %v588 = vmul.f32 %v585, 0.001953125
  %v589 = vmul.f32 %v517, %v517
  %v590 = vsub.f32 %v588, %v589
  %v591 = vld [vmem:[%s3] sm:$0x1]
  %v592 = vadd.f32 %v590, 1e-05
  %v593 = vrsqrt.pop %v592
  %v594 = vmul.f32 %v591, %v593
  %v595 = vld [vmem:[%s4] sm:$0x1]
  %v596 = vmul.f32 %v517, %v594
  %v597 = vsub.f32 %v595, %v596
  %vm598 = vcmask 64512
  %v600 = vsel %vm598, %v594, 0
  %602 = vmatprep.subr.mxu0 0.0
  %603 = vmatpush1.msra.mxu0 0.0
  %604 = vmatprep.subr.mxu0 0.0
  %605 = vmatpush1.msra.mxu0 0.0
  %606 = vmatprep.subr.mxu0 0.0
  %607 = vmatpush1.msra.mxu0 0.0
  %608 = vmatprep.subr.mxu0 0.0
  %609 = vmatpush1.msra.mxu0 0.0
  %610 = vmatprep.subr.mxu0 0.0
  %611 = vmatpush1.msra.mxu0 0.0
  %612 = vmatprep.subr.mxu0 0.0
  %613 = vmatpush1.msra.mxu0 0.0
  %614 = vmatprep.subr.mxu0 0.0
  %615 = vmatpush1.msra.mxu0 0.0
  %616 = vmatprep.subr.mxu0 0.0
  %617 = vmatpush1.msra.mxu0 0.0
  %618 = vmatprep.subr.mxu0 0.0
  %619 = vmatpush1.msra.mxu0 0.0
  %620 = vmatprep.subr.mxu0 0.0
  %621 = vmatpush1.msra.mxu0 0.0
  %622 = vmatprep.subr.mxu0 0.0
  %623 = vmatpush1.msra.mxu0 0.0
  %624 = vmatprep.subr.mxu0 0.0
  %625 = vmatpush1.msra.mxu0 0.0
  %626 = vmatprep.subr.mxu0 0.0
  %627 = vmatpush1.msra.mxu0 0.0
  %628 = vmatprep.subr.mxu0 0.0
  %629 = vmatpush1.msra.mxu0 0.0
  %630 = vmatprep.subr.mxu0 0.0
  %631 = vmatpush1.msra.mxu0 0.0
  %632 = vmatprep.subr.mxu0 0.0
  %633 = vmatpush1.msra.mxu0 %v61
  %634 = vmatprep.subr.mxu0 0.0
  %635 = vmatpush2.msra.mxu0 0.0
  %636 = vmatprep.subr.mxu0 0.0
  %637 = vmatpush2.msra.mxu0 0.0
  %638 = vmatprep.subr.mxu0 0.0
  %639 = vmatpush2.msra.mxu0 0.0
  %640 = vmatprep.subr.mxu0 0.0
  %641 = vmatpush2.msra.mxu0 0.0
  %642 = vmatprep.subr.mxu0 0.0
  %643 = vmatpush2.msra.mxu0 0.0
  %644 = vmatprep.subr.mxu0 0.0
  %645 = vmatpush2.msra.mxu0 0.0
  %646 = vmatprep.subr.mxu0 0.0
  %647 = vmatpush2.msra.mxu0 0.0
  %648 = vmatprep.subr.mxu0 0.0
  %649 = vmatpush2.msra.mxu0 0.0
  %650 = vmatprep.subr.mxu0 0.0
  %651 = vmatpush2.msra.mxu0 0.0
  %652 = vmatprep.subr.mxu0 0.0
  %653 = vmatpush2.msra.mxu0 0.0
  %654 = vmatprep.subr.mxu0 0.0
  %655 = vmatpush2.msra.mxu0 0.0
  %656 = vmatprep.subr.mxu0 0.0
  %657 = vmatpush2.msra.mxu0 0.0
  %658 = vmatprep.subr.mxu0 0.0
  %659 = vmatpush2.msra.mxu0 0.0
  %660 = vmatprep.subr.mxu0 0.0
  %661 = vmatpush2.msra.mxu0 0.0
  %662 = vmatprep.subr.mxu0 0.0
  %663 = vmatpush2.msra.mxu0 0.0
  %664 = vmatprep.subr.mxu0 0.0
  %665 = vmatpush2.msra.mxu0 0.0
  %666 = vmatprep.mubr.f32.mxu0 0.0
  %667 = vmatmul.mubr.f32.gmra.mxu0 %v600
  %v668 = vpop.f32.mrf.mxu0
  %v669 = vadd.f32 0.0, %v668
  %v670 = vpop.f32.mrf.mxu0
  %671 = vdwg.mxu0
  %v673 = vsel %vm598, %v597, 0
  %675 = vmatprep.subr.mxu0 0.0
  %676 = vmatpush1.msra.mxu0 0.0
  %677 = vmatprep.subr.mxu0 0.0
  %678 = vmatpush1.msra.mxu0 0.0
  %679 = vmatprep.subr.mxu0 0.0
  %680 = vmatpush1.msra.mxu0 0.0
  %681 = vmatprep.subr.mxu0 0.0
  %682 = vmatpush1.msra.mxu0 0.0
  %683 = vmatprep.subr.mxu0 0.0
  %684 = vmatpush1.msra.mxu0 0.0
  %685 = vmatprep.subr.mxu0 0.0
  %686 = vmatpush1.msra.mxu0 0.0
  %687 = vmatprep.subr.mxu0 0.0
  %688 = vmatpush1.msra.mxu0 0.0
  %689 = vmatprep.subr.mxu0 0.0
  %690 = vmatpush1.msra.mxu0 0.0
  %691 = vmatprep.subr.mxu0 0.0
  %692 = vmatpush1.msra.mxu0 0.0
  %693 = vmatprep.subr.mxu0 0.0
  %694 = vmatpush1.msra.mxu0 0.0
  %695 = vmatprep.subr.mxu0 0.0
  %696 = vmatpush1.msra.mxu0 0.0
  %697 = vmatprep.subr.mxu0 0.0
  %698 = vmatpush1.msra.mxu0 0.0
  %699 = vmatprep.subr.mxu0 0.0
  %700 = vmatpush1.msra.mxu0 0.0
  %701 = vmatprep.subr.mxu0 0.0
  %702 = vmatpush1.msra.mxu0 0.0
  %703 = vmatprep.subr.mxu0 0.0
  %704 = vmatpush1.msra.mxu0 0.0
  %705 = vmatprep.subr.mxu0 0.0
  %706 = vmatpush1.msra.mxu0 %v61
  %707 = vmatprep.subr.mxu0 0.0
  %708 = vmatpush2.msra.mxu0 0.0
  %709 = vmatprep.subr.mxu0 0.0
  %710 = vmatpush2.msra.mxu0 0.0
  %711 = vmatprep.subr.mxu0 0.0
  %712 = vmatpush2.msra.mxu0 0.0
  %713 = vmatprep.subr.mxu0 0.0
  %714 = vmatpush2.msra.mxu0 0.0
  %715 = vmatprep.subr.mxu0 0.0
  %716 = vmatpush2.msra.mxu0 0.0
  %717 = vmatprep.subr.mxu0 0.0
  %718 = vmatpush2.msra.mxu0 0.0
  %719 = vmatprep.subr.mxu0 0.0
  %720 = vmatpush2.msra.mxu0 0.0
  %721 = vmatprep.subr.mxu0 0.0
  %722 = vmatpush2.msra.mxu0 0.0
  %723 = vmatprep.subr.mxu0 0.0
  %724 = vmatpush2.msra.mxu0 0.0
  %725 = vmatprep.subr.mxu0 0.0
  %726 = vmatpush2.msra.mxu0 0.0
  %727 = vmatprep.subr.mxu0 0.0
  %728 = vmatpush2.msra.mxu0 0.0
  %729 = vmatprep.subr.mxu0 0.0
  %730 = vmatpush2.msra.mxu0 0.0
  %731 = vmatprep.subr.mxu0 0.0
  %732 = vmatpush2.msra.mxu0 0.0
  %733 = vmatprep.subr.mxu0 0.0
  %734 = vmatpush2.msra.mxu0 0.0
  %735 = vmatprep.subr.mxu0 0.0
  %736 = vmatpush2.msra.mxu0 0.0
  %737 = vmatprep.subr.mxu0 0.0
  %738 = vmatpush2.msra.mxu0 0.0
  %739 = vmatprep.mubr.f32.mxu0 0.0
  %740 = vmatmul.mubr.f32.gmra.mxu0 %v673
  %v741 = vpop.f32.mrf.mxu0
  %v742 = vadd.f32 0.0, %v741
  %v743 = vpop.f32.mrf.mxu0
  %744 = vdwg.mxu0
  %v745 = vlaneseq
  %v746 = vshrl.u32 %v745, 7
  %v747 = vsub.s32 0, %v746
  %v748 = vrot.slane %v669, %v747
  %v749 = vmul.f32 %v421, %v748
  %v750 = vmul.f32 %v422, %v748
  %v751 = vmul.f32 %v423, %v748
  %v752 = vmul.f32 %v424, %v748
  %v753 = vlaneseq
  %v754 = vshrl.u32 %v753, 7
  %v755 = vsub.s32 0, %v754
  %v756 = vrot.slane %v742, %v755
  %v757 = vadd.f32 %v749, %v756
  %v758 = vadd.f32 %v750, %v756
  %v759 = vadd.f32 %v751, %v756
  %v760 = vadd.f32 %v752, %v756
  %v761 = vmax.f32 %v757, 0.0
  %v762 = vmax.f32 %v758, 0.0
  %v763 = vmax.f32 %v759, 0.0
  %v764 = vmax.f32 %v760, 0.0
  %765 = vst [vmem:[#allocation3] sm:$0x1] 0.0
  %766 = vst [vmem:[#allocation3 + $0x18] sm:$0x1] 0.0
  %767 = vst [vmem:[#allocation3 + $0x11] sm:$0x1] 0.0
  %768 = vst [vmem:[#allocation3 + $0x29] sm:$0x1] 0.0
  %769 = vst [vmem:[#allocation3 + $0x1] sm:$0xff] %v761
  %770 = vst [vmem:[#allocation3 + $0x9] sm:$0xff] %v762
  %771 = vst [vmem:[#allocation3 + $0x19] sm:$0xff] %v763
  %772 = vst [vmem:[#allocation3 + $0x21] sm:$0xff] %v764
  %v773 = vld [vmem:[#allocation3] sm:$0xff]
  %v774 = vld [vmem:[#allocation3 + $0x8] sm:$0xff]
  %v775 = vld [vmem:[#allocation3 + $0x18] sm:$0xff]
  %v776 = vld [vmem:[#allocation3 + $0x20] sm:$0xff]
  %v777 = vpack.c.bf16 %v774, %v773
  %v778 = vpack.c.bf16 %v776, %v775
  %v779 = vld [vmem:[%s2] sm:$0xf]
  %v780 = vld [vmem:[%s2 + $0x4] sm:$0xf]
  %v781 = vld [vmem:[%s2 + $0x8] sm:$0xf]
  %v782 = vld [vmem:[%s2 + $0xc] sm:$0xf]
  %v783 = vld [vmem:[%s2 + $0x10] sm:$0xf]
  %v784 = vld [vmem:[%s2 + $0x14] sm:$0xf]
  %v785 = vld [vmem:[%s2 + $0x18] sm:$0xf]
  %v786 = vld [vmem:[%s2 + $0x1c] sm:$0xf]
  %v787 = vld [vmem:[%s2 + $0x20] sm:$0xf]
  %v788 = vld [vmem:[%s2 + $0x24] sm:$0xf]
  %v789 = vld [vmem:[%s2 + $0x28] sm:$0xf]
  %v790 = vld [vmem:[%s2 + $0x2c] sm:$0xf]
  %v791 = vld [vmem:[%s2 + $0x30] sm:$0xf]
  %v792 = vld [vmem:[%s2 + $0x34] sm:$0xf]
  %v793 = vld [vmem:[%s2 + $0x38] sm:$0xf]
  %v794 = vld [vmem:[%s2 + $0x3c] sm:$0xf]
  %v795 = vld [vmem:[#allocation3 + $0x1] sm:$0xff]
  %v796 = vld [vmem:[#allocation3 + $0x9] sm:$0xff]
  %v797 = vld [vmem:[#allocation3 + $0x19] sm:$0xff]
  %v798 = vld [vmem:[#allocation3 + $0x21] sm:$0xff]
  %v799 = vpack.c.bf16 %v796, %v795
  %v800 = vpack.c.bf16 %v798, %v797
  %s801 = scalar_lea.vmem %s2, 64
  %v802 = vld [vmem:[%s801] sm:$0xf]
  %v803 = vld [vmem:[%s801 + $0x4] sm:$0xf]
  %v804 = vld [vmem:[%s801 + $0x8] sm:$0xf]
  %v805 = vld [vmem:[%s801 + $0xc] sm:$0xf]
  %v806 = vld [vmem:[%s801 + $0x10] sm:$0xf]
  %v807 = vld [vmem:[%s801 + $0x14] sm:$0xf]
  %v808 = vld [vmem:[%s801 + $0x18] sm:$0xf]
  %v809 = vld [vmem:[%s801 + $0x1c] sm:$0xf]
  %v810 = vld [vmem:[%s801 + $0x20] sm:$0xf]
  %v811 = vld [vmem:[%s801 + $0x24] sm:$0xf]
  %v812 = vld [vmem:[%s801 + $0x28] sm:$0xf]
  %v813 = vld [vmem:[%s801 + $0x2c] sm:$0xf]
  %v814 = vld [vmem:[%s801 + $0x30] sm:$0xf]
  %v815 = vld [vmem:[%s801 + $0x34] sm:$0xf]
  %v816 = vld [vmem:[%s801 + $0x38] sm:$0xf]
  %v817 = vld [vmem:[%s801 + $0x3c] sm:$0xf]
  %v834 = vunpack.c.l.b16 %v802
  %v835 = vunpack.c.l.b16 %v803
  %v836 = vunpack.c.l.b16 %v804
  %v837 = vunpack.c.l.b16 %v805
  %v838 = vunpack.c.l.b16 %v806
  %v839 = vunpack.c.l.b16 %v807
  %v840 = vunpack.c.l.b16 %v808
  %v841 = vunpack.c.l.b16 %v809
  %v842 = vunpack.c.l.b16 %v810
  %v843 = vunpack.c.l.b16 %v811
  %v844 = vunpack.c.l.b16 %v812
  %v845 = vunpack.c.l.b16 %v813
  %v846 = vunpack.c.l.b16 %v814
  %v847 = vunpack.c.l.b16 %v815
  %v848 = vunpack.c.l.b16 %v816
  %v849 = vunpack.c.l.b16 %v817
  %v850 = vpack.c.b16 %v835, %v834
  %v851 = vpack.c.b16 %v837, %v836
  %v852 = vpack.c.b16 %v839, %v838
  %v853 = vpack.c.b16 %v841, %v840
  %v854 = vpack.c.b16 %v843, %v842
  %v855 = vpack.c.b16 %v845, %v844
  %v856 = vpack.c.b16 %v847, %v846
  %v857 = vpack.c.b16 %v849, %v848
  %866 = vmatprep.subr.bf16.mxu0 0
  %867 = vmatpush1.bf16.msra.mxu0 %v857
  %868 = vmatprep.subr.bf16.mxu0 0
  %869 = vmatpush1.bf16.msra.mxu0 %v856
  %870 = vmatprep.subr.bf16.mxu0 0
  %871 = vmatpush1.bf16.msra.mxu0 %v855
  %872 = vmatprep.subr.bf16.mxu0 0
  %873 = vmatpush1.bf16.msra.mxu0 %v854
  %874 = vmatprep.subr.bf16.mxu0 0
  %875 = vmatpush1.bf16.msra.mxu0 %v853
  %876 = vmatprep.subr.bf16.mxu0 0
  %877 = vmatpush1.bf16.msra.mxu0 %v852
  %878 = vmatprep.subr.bf16.mxu0 0
  %879 = vmatpush1.bf16.msra.mxu0 %v851
  %880 = vmatprep.subr.bf16.mxu0 0
  %881 = vmatpush1.bf16.msra.mxu0 %v850
  %882 = vmatprep.subr.bf16.mxu0 0
  %883 = vmatpush2.bf16.msra.mxu0 0
  %884 = vmatprep.subr.bf16.mxu0 0
  %885 = vmatpush2.bf16.msra.mxu0 0
  %886 = vmatprep.subr.bf16.mxu0 0
  %887 = vmatpush2.bf16.msra.mxu0 0
  %888 = vmatprep.subr.bf16.mxu0 0
  %889 = vmatpush2.bf16.msra.mxu0 0
  %890 = vmatprep.subr.bf16.mxu0 0
  %891 = vmatpush2.bf16.msra.mxu0 0
  %892 = vmatprep.subr.bf16.mxu0 0
  %893 = vmatpush2.bf16.msra.mxu0 0
  %894 = vmatprep.subr.bf16.mxu0 0
  %895 = vmatpush2.bf16.msra.mxu0 0
  %896 = vmatprep.subr.bf16.mxu0 0
  %897 = vmatpush2.bf16.msra.mxu0 0
  %898 = vmatprep.mubr.bf16.mxu0 0
  %899 = vmatmul.mubr.bf16.gmra.mxu0 %v799
  %v900 = vpop.f32.mrf.mxu0
  %v901 = vadd.f32 0.0, %v900
  %v902 = vpop.f32.mrf.mxu0
  %v903 = vpop.f32.mrf.mxu0
  %v904 = vadd.f32 0.0, %v903
  %v905 = vpop.f32.mrf.mxu0
  %906 = vmatprep.mubr.bf16.mxu0 0
  %907 = vmatmul.mubr.bf16.gmra.mxu0 %v800
  %v908 = vpop.f32.mrf.mxu0
  %v909 = vadd.f32 0.0, %v908
  %v910 = vpop.f32.mrf.mxu0
  %v911 = vpop.f32.mrf.mxu0
  %v912 = vadd.f32 0.0, %v911
  %v913 = vpop.f32.mrf.mxu0
  %914 = vdwg.mxu0
  %v931 = vunpack.c.l.b16 %v779
  %v932 = vunpack.c.l.b16 %v780
  %v933 = vunpack.c.l.b16 %v781
  %v934 = vunpack.c.l.b16 %v782
  %v935 = vunpack.c.l.b16 %v783
  %v936 = vunpack.c.l.b16 %v784
  %v937 = vunpack.c.l.b16 %v785
  %v938 = vunpack.c.l.b16 %v786
  %v939 = vunpack.c.l.b16 %v787
  %v940 = vunpack.c.l.b16 %v788
  %v941 = vunpack.c.l.b16 %v789
  %v942 = vunpack.c.l.b16 %v790
  %v943 = vunpack.c.l.b16 %v791
  %v944 = vunpack.c.l.b16 %v792
  %v945 = vunpack.c.l.b16 %v793
  %v946 = vunpack.c.l.b16 %v794
  %v947 = vpack.c.b16 %v932, %v931
  %v948 = vpack.c.b16 %v934, %v933
  %v949 = vpack.c.b16 %v936, %v935
  %v950 = vpack.c.b16 %v938, %v937
  %v951 = vpack.c.b16 %v940, %v939
  %v952 = vpack.c.b16 %v942, %v941
  %v953 = vpack.c.b16 %v944, %v943
  %v954 = vpack.c.b16 %v946, %v945
  %963 = vmatprep.subr.bf16.mxu0 0
  %964 = vmatpush1.bf16.msra.mxu0 %v954
  %965 = vmatprep.subr.bf16.mxu0 0
  %966 = vmatpush1.bf16.msra.mxu0 %v953
  %967 = vmatprep.subr.bf16.mxu0 0
  %968 = vmatpush1.bf16.msra.mxu0 %v952
  %969 = vmatprep.subr.bf16.mxu0 0
  %970 = vmatpush1.bf16.msra.mxu0 %v951
  %971 = vmatprep.subr.bf16.mxu0 0
  %972 = vmatpush1.bf16.msra.mxu0 %v950
  %973 = vmatprep.subr.bf16.mxu0 0
  %974 = vmatpush1.bf16.msra.mxu0 %v949
  %975 = vmatprep.subr.bf16.mxu0 0
  %976 = vmatpush1.bf16.msra.mxu0 %v948
  %977 = vmatprep.subr.bf16.mxu0 0
  %978 = vmatpush1.bf16.msra.mxu0 %v947
  %979 = vmatprep.subr.bf16.mxu0 0
  %980 = vmatpush2.bf16.msra.mxu0 0
  %981 = vmatprep.subr.bf16.mxu0 0
  %982 = vmatpush2.bf16.msra.mxu0 0
  %983 = vmatprep.subr.bf16.mxu0 0
  %984 = vmatpush2.bf16.msra.mxu0 0
  %985 = vmatprep.subr.bf16.mxu0 0
  %986 = vmatpush2.bf16.msra.mxu0 0
  %987 = vmatprep.subr.bf16.mxu0 0
  %988 = vmatpush2.bf16.msra.mxu0 0
  %989 = vmatprep.subr.bf16.mxu0 0
  %990 = vmatpush2.bf16.msra.mxu0 0
  %991 = vmatprep.subr.bf16.mxu0 0
  %992 = vmatpush2.bf16.msra.mxu0 0
  %993 = vmatprep.subr.bf16.mxu0 0
  %994 = vmatpush2.bf16.msra.mxu0 0
  %995 = vmatprep.mubr.bf16.mxu0 0
  %996 = vmatmul.mubr.bf16.gmra.mxu0 %v777
  %v997 = vpop.f32.mrf.mxu0
  %v998 = vadd.f32 %v901, %v997
  %v999 = vpop.f32.mrf.mxu0
  %v1000 = vpop.f32.mrf.mxu0
  %v1001 = vadd.f32 %v904, %v1000
  %v1002 = vpop.f32.mrf.mxu0
  %1003 = vmatprep.mubr.bf16.mxu0 0
  %1004 = vmatmul.mubr.bf16.gmra.mxu0 %v778
  %v1005 = vpop.f32.mrf.mxu0
  %v1006 = vadd.f32 %v909, %v1005
  %v1007 = vpop.f32.mrf.mxu0
  %v1008 = vpop.f32.mrf.mxu0
  %v1009 = vadd.f32 %v912, %v1008
  %v1010 = vpop.f32.mrf.mxu0
  %1011 = vdwg.mxu0
  %v1012 = vld [vmem:[#allocation3 + $0x2] sm:$0xff]
  %v1013 = vld [vmem:[#allocation3 + $0xa] sm:$0xff]
  %v1014 = vld [vmem:[#allocation3 + $0x1a] sm:$0xff]
  %v1015 = vld [vmem:[#allocation3 + $0x22] sm:$0xff]
  %v1016 = vpack.c.bf16 %v1013, %v1012
  %v1017 = vpack.c.bf16 %v1015, %v1014
  %s1018 = scalar_lea.vmem %s2, 128
  %v1019 = vld [vmem:[%s1018] sm:$0xf]
  %v1020 = vld [vmem:[%s1018 + $0x4] sm:$0xf]
  %v1021 = vld [vmem:[%s1018 + $0x8] sm:$0xf]
  %v1022 = vld [vmem:[%s1018 + $0xc] sm:$0xf]
  %v1023 = vld [vmem:[%s1018 + $0x10] sm:$0xf]
  %v1024 = vld [vmem:[%s1018 + $0x14] sm:$0xf]
  %v1025 = vld [vmem:[%s1018 + $0x18] sm:$0xf]
  %v1026 = vld [vmem:[%s1018 + $0x1c] sm:$0xf]
  %v1027 = vld [vmem:[%s1018 + $0x20] sm:$0xf]
  %v1028 = vld [vmem:[%s1018 + $0x24] sm:$0xf]
  %v1029 = vld [vmem:[%s1018 + $0x28] sm:$0xf]
  %v1030 = vld [vmem:[%s1018 + $0x2c] sm:$0xf]
  %v1031 = vld [vmem:[%s1018 + $0x30] sm:$0xf]
  %v1032 = vld [vmem:[%s1018 + $0x34] sm:$0xf]
  %v1033 = vld [vmem:[%s1018 + $0x38] sm:$0xf]
  %v1034 = vld [vmem:[%s1018 + $0x3c] sm:$0xf]
  %v1051 = vunpack.c.l.b16 %v1019
  %v1052 = vunpack.c.l.b16 %v1020
  %v1053 = vunpack.c.l.b16 %v1021
  %v1054 = vunpack.c.l.b16 %v1022
  %v1055 = vunpack.c.l.b16 %v1023
  %v1056 = vunpack.c.l.b16 %v1024
  %v1057 = vunpack.c.l.b16 %v1025
  %v1058 = vunpack.c.l.b16 %v1026
  %v1059 = vunpack.c.l.b16 %v1027
  %v1060 = vunpack.c.l.b16 %v1028
  %v1061 = vunpack.c.l.b16 %v1029
  %v1062 = vunpack.c.l.b16 %v1030
  %v1063 = vunpack.c.l.b16 %v1031
  %v1064 = vunpack.c.l.b16 %v1032
  %v1065 = vunpack.c.l.b16 %v1033
  %v1066 = vunpack.c.l.b16 %v1034
  %v1067 = vpack.c.b16 %v1052, %v1051
  %v1068 = vpack.c.b16 %v1054, %v1053
  %v1069 = vpack.c.b16 %v1056, %v1055
  %v1070 = vpack.c.b16 %v1058, %v1057
  %v1071 = vpack.c.b16 %v1060, %v1059
  %v1072 = vpack.c.b16 %v1062, %v1061
  %v1073 = vpack.c.b16 %v1064, %v1063
  %v1074 = vpack.c.b16 %v1066, %v1065
  %1083 = vmatprep.subr.bf16.mxu0 0
  %1084 = vmatpush1.bf16.msra.mxu0 %v1074
  %1085 = vmatprep.subr.bf16.mxu0 0
  %1086 = vmatpush1.bf16.msra.mxu0 %v1073
  %1087 = vmatprep.subr.bf16.mxu0 0
  %1088 = vmatpush1.bf16.msra.mxu0 %v1072
  %1089 = vmatprep.subr.bf16.mxu0 0
  %1090 = vmatpush1.bf16.msra.mxu0 %v1071
  %1091 = vmatprep.subr.bf16.mxu0 0
  %1092 = vmatpush1.bf16.msra.mxu0 %v1070
  %1093 = vmatprep.subr.bf16.mxu0 0
  %1094 = vmatpush1.bf16.msra.mxu0 %v1069
  %1095 = vmatprep.subr.bf16.mxu0 0
  %1096 = vmatpush1.bf16.msra.mxu0 %v1068
  %1097 = vmatprep.subr.bf16.mxu0 0
  %1098 = vmatpush1.bf16.msra.mxu0 %v1067
  %1099 = vmatprep.subr.bf16.mxu0 0
  %1100 = vmatpush2.bf16.msra.mxu0 0
  %1101 = vmatprep.subr.bf16.mxu0 0
  %1102 = vmatpush2.bf16.msra.mxu0 0
  %1103 = vmatprep.subr.bf16.mxu0 0
  %1104 = vmatpush2.bf16.msra.mxu0 0
  %1105 = vmatprep.subr.bf16.mxu0 0
  %1106 = vmatpush2.bf16.msra.mxu0 0
  %1107 = vmatprep.subr.bf16.mxu0 0
  %1108 = vmatpush2.bf16.msra.mxu0 0
  %1109 = vmatprep.subr.bf16.mxu0 0
  %1110 = vmatpush2.bf16.msra.mxu0 0
  %1111 = vmatprep.subr.bf16.mxu0 0
  %1112 = vmatpush2.bf16.msra.mxu0 0
  %1113 = vmatprep.subr.bf16.mxu0 0
  %1114 = vmatpush2.bf16.msra.mxu0 0
  %1115 = vmatprep.mubr.bf16.mxu0 0
  %1116 = vmatmul.mubr.bf16.gmra.mxu0 %v1016
  %v1117 = vpop.f32.mrf.mxu0
  %v1118 = vadd.f32 0.0, %v1117
  %v1119 = vpop.f32.mrf.mxu0
  %v1120 = vpop.f32.mrf.mxu0
  %v1121 = vadd.f32 0.0, %v1120
  %v1122 = vpop.f32.mrf.mxu0
  %1123 = vmatprep.mubr.bf16.mxu0 0
  %1124 = vmatmul.mubr.bf16.gmra.mxu0 %v1017
  %v1125 = vpop.f32.mrf.mxu0
  %v1126 = vadd.f32 0.0, %v1125
  %v1127 = vpop.f32.mrf.mxu0
  %v1128 = vpop.f32.mrf.mxu0
  %v1129 = vadd.f32 0.0, %v1128
  %v1130 = vpop.f32.mrf.mxu0
  %1131 = vdwg.mxu0
  %v1132 = vadd.f32 %v998, %v1118
  %v1133 = vadd.f32 %v1001, %v1121
  %v1134 = vadd.f32 %v1006, %v1126
  %v1135 = vadd.f32 %v1009, %v1129
  %v1136 = vadd.f32 %v1132, %v1133
  %v1137 = vadd.f32 %v1136, %v1134
  %v1138 = vadd.f32 %v1137, %v1135
  %v1139 = vrot.slane %v1138, 4
  %v1140 = vadd.f32 %v1138, %v1139
  %v1141 = vrot.slane %v1140, 2
  %v1142 = vadd.f32 %v1140, %v1141
  %v1143 = vrot.slane %v1142, 1
  %v1144 = vadd.f32 %v1142, %v1143
  %v1145 = vmul.f32 %v1132, %v1132
  %v1146 = vmul.f32 %v1133, %v1133
  %v1147 = vmul.f32 %v1134, %v1134
  %v1148 = vmul.f32 %v1135, %v1135
  %v1149 = vadd.f32 %v1145, %v1146
  %v1150 = vadd.f32 %v1149, %v1147
  %v1151 = vadd.f32 %v1150, %v1148
  %v1152 = vrot.slane %v1151, 4
  %v1153 = vadd.f32 %v1151, %v1152
  %v1154 = vrot.slane %v1153, 2
  %v1155 = vadd.f32 %v1153, %v1154
  %v1156 = vrot.slane %v1155, 1
  %v1157 = vadd.f32 %v1155, %v1156
  %1158 = vmatprep.subr.mxu0 0.0
  %1159 = vmatpush1.msra.mxu0 %v60
  %1160 = vmatprep.subr.mxu0 0.0
  %1161 = vmatpush1.msra.mxu0 %v59
  %1162 = vmatprep.subr.mxu0 0.0
  %1163 = vmatpush1.msra.mxu0 %v58
  %1164 = vmatprep.subr.mxu0 0.0
  %1165 = vmatpush1.msra.mxu0 %v57
  %1166 = vmatprep.subr.mxu0 0.0
  %1167 = vmatpush1.msra.mxu0 %v56
  %1168 = vmatprep.subr.mxu0 0.0
  %1169 = vmatpush1.msra.mxu0 %v55
  %1170 = vmatprep.subr.mxu0 0.0
  %1171 = vmatpush1.msra.mxu0 %v54
  %1172 = vmatprep.subr.mxu0 0.0
  %1173 = vmatpush1.msra.mxu0 %v53
  %1174 = vmatprep.subr.mxu0 0.0
  %1175 = vmatpush1.msra.mxu0 %v52
  %1176 = vmatprep.subr.mxu0 0.0
  %1177 = vmatpush1.msra.mxu0 %v51
  %1178 = vmatprep.subr.mxu0 0.0
  %1179 = vmatpush1.msra.mxu0 %v50
  %1180 = vmatprep.subr.mxu0 0.0
  %1181 = vmatpush1.msra.mxu0 %v49
  %1182 = vmatprep.subr.mxu0 0.0
  %1183 = vmatpush1.msra.mxu0 %v48
  %1184 = vmatprep.subr.mxu0 0.0
  %1185 = vmatpush1.msra.mxu0 %v47
  %1186 = vmatprep.subr.mxu0 0.0
  %1187 = vmatpush1.msra.mxu0 %v46
  %1188 = vmatprep.subr.mxu0 0.0
  %1189 = vmatpush1.msra.mxu0 %v45
  %1190 = vmatprep.subr.mxu0 0.0
  %1191 = vmatpush2.msra.mxu0 0.0
  %1192 = vmatprep.subr.mxu0 0.0
  %1193 = vmatpush2.msra.mxu0 0.0
  %1194 = vmatprep.subr.mxu0 0.0
  %1195 = vmatpush2.msra.mxu0 0.0
  %1196 = vmatprep.subr.mxu0 0.0
  %1197 = vmatpush2.msra.mxu0 0.0
  %1198 = vmatprep.subr.mxu0 0.0
  %1199 = vmatpush2.msra.mxu0 0.0
  %1200 = vmatprep.subr.mxu0 0.0
  %1201 = vmatpush2.msra.mxu0 0.0
  %1202 = vmatprep.subr.mxu0 0.0
  %1203 = vmatpush2.msra.mxu0 0.0
  %1204 = vmatprep.subr.mxu0 0.0
  %1205 = vmatpush2.msra.mxu0 0.0
  %1206 = vmatprep.subr.mxu0 0.0
  %1207 = vmatpush2.msra.mxu0 0.0
  %1208 = vmatprep.subr.mxu0 0.0
  %1209 = vmatpush2.msra.mxu0 0.0
  %1210 = vmatprep.subr.mxu0 0.0
  %1211 = vmatpush2.msra.mxu0 0.0
  %1212 = vmatprep.subr.mxu0 0.0
  %1213 = vmatpush2.msra.mxu0 0.0
  %1214 = vmatprep.subr.mxu0 0.0
  %1215 = vmatpush2.msra.mxu0 0.0
  %1216 = vmatprep.subr.mxu0 0.0
  %1217 = vmatpush2.msra.mxu0 0.0
  %1218 = vmatprep.subr.mxu0 0.0
  %1219 = vmatpush2.msra.mxu0 0.0
  %1220 = vmatprep.subr.mxu0 0.0
  %1221 = vmatpush2.msra.mxu0 0.0
  %1222 = vmatprep.mubr.f32.mxu0 0.0
  %1223 = vmatmul.mubr.f32.gmra.mxu0 %v1144
  %v1224 = vpop.f32.mrf.mxu0
  %v1225 = vadd.f32 0.0, %v1224
  %v1226 = vpop.f32.mrf.mxu0
  %1227 = vdwg.mxu0
  %v1228 = vmul.f32 %v1225, 0.001953125
  %1229 = vmatprep.subr.mxu0 0.0
  %1230 = vmatpush1.msra.mxu0 %v60
  %1231 = vmatprep.subr.mxu0 0.0
  %1232 = vmatpush1.msra.mxu0 %v59
  %1233 = vmatprep.subr.mxu0 0.0
  %1234 = vmatpush1.msra.mxu0 %v58
  %1235 = vmatprep.subr.mxu0 0.0
  %1236 = vmatpush1.msra.mxu0 %v57
  %1237 = vmatprep.subr.mxu0 0.0
  %1238 = vmatpush1.msra.mxu0 %v56
  %1239 = vmatprep.subr.mxu0 0.0
  %1240 = vmatpush1.msra.mxu0 %v55
  %1241 = vmatprep.subr.mxu0 0.0
  %1242 = vmatpush1.msra.mxu0 %v54
  %1243 = vmatprep.subr.mxu0 0.0
  %1244 = vmatpush1.msra.mxu0 %v53
  %1245 = vmatprep.subr.mxu0 0.0
  %1246 = vmatpush1.msra.mxu0 %v52
  %1247 = vmatprep.subr.mxu0 0.0
  %1248 = vmatpush1.msra.mxu0 %v51
  %1249 = vmatprep.subr.mxu0 0.0
  %1250 = vmatpush1.msra.mxu0 %v50
  %1251 = vmatprep.subr.mxu0 0.0
  %1252 = vmatpush1.msra.mxu0 %v49
  %1253 = vmatprep.subr.mxu0 0.0
  %1254 = vmatpush1.msra.mxu0 %v48
  %1255 = vmatprep.subr.mxu0 0.0
  %1256 = vmatpush1.msra.mxu0 %v47
  %1257 = vmatprep.subr.mxu0 0.0
  %1258 = vmatpush1.msra.mxu0 %v46
  %1259 = vmatprep.subr.mxu0 0.0
  %1260 = vmatpush1.msra.mxu0 %v45
  %1261 = vmatprep.subr.mxu0 0.0
  %1262 = vmatpush2.msra.mxu0 0.0
  %1263 = vmatprep.subr.mxu0 0.0
  %1264 = vmatpush2.msra.mxu0 0.0
  %1265 = vmatprep.subr.mxu0 0.0
  %1266 = vmatpush2.msra.mxu0 0.0
  %1267 = vmatprep.subr.mxu0 0.0
  %1268 = vmatpush2.msra.mxu0 0.0
  %1269 = vmatprep.subr.mxu0 0.0
  %1270 = vmatpush2.msra.mxu0 0.0
  %1271 = vmatprep.subr.mxu0 0.0
  %1272 = vmatpush2.msra.mxu0 0.0
  %1273 = vmatprep.subr.mxu0 0.0
  %1274 = vmatpush2.msra.mxu0 0.0
  %1275 = vmatprep.subr.mxu0 0.0
  %1276 = vmatpush2.msra.mxu0 0.0
  %1277 = vmatprep.subr.mxu0 0.0
  %1278 = vmatpush2.msra.mxu0 0.0
  %1279 = vmatprep.subr.mxu0 0.0
  %1280 = vmatpush2.msra.mxu0 0.0
  %1281 = vmatprep.subr.mxu0 0.0
  %1282 = vmatpush2.msra.mxu0 0.0
  %1283 = vmatprep.subr.mxu0 0.0
  %1284 = vmatpush2.msra.mxu0 0.0
  %1285 = vmatprep.subr.mxu0 0.0
  %1286 = vmatpush2.msra.mxu0 0.0
  %1287 = vmatprep.subr.mxu0 0.0
  %1288 = vmatpush2.msra.mxu0 0.0
  %1289 = vmatprep.subr.mxu0 0.0
  %1290 = vmatpush2.msra.mxu0 0.0
  %1291 = vmatprep.subr.mxu0 0.0
  %1292 = vmatpush2.msra.mxu0 0.0
  %1293 = vmatprep.mubr.f32.mxu0 0.0
  %1294 = vmatmul.mubr.f32.gmra.mxu0 %v1157
  %v1295 = vpop.f32.mrf.mxu0
  %v1296 = vadd.f32 0.0, %v1295
  %v1297 = vpop.f32.mrf.mxu0
  %1298 = vdwg.mxu0
  %v1299 = vmul.f32 %v1296, 0.001953125
  %v1300 = vmul.f32 %v1228, %v1228
  %v1301 = vsub.f32 %v1299, %v1300
  %v1302 = vld [vmem:[%s5] sm:$0x1]
  %v1303 = vadd.f32 %v1301, 1e-05
  %v1304 = vrsqrt.pop %v1303
  %v1305 = vmul.f32 %v1302, %v1304
  %v1306 = vld [vmem:[%s6] sm:$0x1]
  %v1307 = vmul.f32 %v1228, %v1305
  %v1308 = vsub.f32 %v1306, %v1307
  %v1310 = vsel %vm598, %v1305, 0
  %1312 = vmatprep.subr.mxu0 0.0
  %1313 = vmatpush1.msra.mxu0 0.0
  %1314 = vmatprep.subr.mxu0 0.0
  %1315 = vmatpush1.msra.mxu0 0.0
  %1316 = vmatprep.subr.mxu0 0.0
  %1317 = vmatpush1.msra.mxu0 0.0
  %1318 = vmatprep.subr.mxu0 0.0
  %1319 = vmatpush1.msra.mxu0 0.0
  %1320 = vmatprep.subr.mxu0 0.0
  %1321 = vmatpush1.msra.mxu0 0.0
  %1322 = vmatprep.subr.mxu0 0.0
  %1323 = vmatpush1.msra.mxu0 0.0
  %1324 = vmatprep.subr.mxu0 0.0
  %1325 = vmatpush1.msra.mxu0 0.0
  %1326 = vmatprep.subr.mxu0 0.0
  %1327 = vmatpush1.msra.mxu0 0.0
  %1328 = vmatprep.subr.mxu0 0.0
  %1329 = vmatpush1.msra.mxu0 0.0
  %1330 = vmatprep.subr.mxu0 0.0
  %1331 = vmatpush1.msra.mxu0 0.0
  %1332 = vmatprep.subr.mxu0 0.0
  %1333 = vmatpush1.msra.mxu0 0.0
  %1334 = vmatprep.subr.mxu0 0.0
  %1335 = vmatpush1.msra.mxu0 0.0
  %1336 = vmatprep.subr.mxu0 0.0
  %1337 = vmatpush1.msra.mxu0 0.0
  %1338 = vmatprep.subr.mxu0 0.0
  %1339 = vmatpush1.msra.mxu0 0.0
  %1340 = vmatprep.subr.mxu0 0.0
  %1341 = vmatpush1.msra.mxu0 0.0
  %1342 = vmatprep.subr.mxu0 0.0
  %1343 = vmatpush1.msra.mxu0 %v61
  %1344 = vmatprep.subr.mxu0 0.0
  %1345 = vmatpush2.msra.mxu0 0.0
  %1346 = vmatprep.subr.mxu0 0.0
  %1347 = vmatpush2.msra.mxu0 0.0
  %1348 = vmatprep.subr.mxu0 0.0
  %1349 = vmatpush2.msra.mxu0 0.0
  %1350 = vmatprep.subr.mxu0 0.0
  %1351 = vmatpush2.msra.mxu0 0.0
  %1352 = vmatprep.subr.mxu0 0.0
  %1353 = vmatpush2.msra.mxu0 0.0
  %1354 = vmatprep.subr.mxu0 0.0
  %1355 = vmatpush2.msra.mxu0 0.0
  %1356 = vmatprep.subr.mxu0 0.0
  %1357 = vmatpush2.msra.mxu0 0.0
  %1358 = vmatprep.subr.mxu0 0.0
  %1359 = vmatpush2.msra.mxu0 0.0
  %1360 = vmatprep.subr.mxu0 0.0
  %1361 = vmatpush2.msra.mxu0 0.0
  %1362 = vmatprep.subr.mxu0 0.0
  %1363 = vmatpush2.msra.mxu0 0.0
  %1364 = vmatprep.subr.mxu0 0.0
  %1365 = vmatpush2.msra.mxu0 0.0
  %1366 = vmatprep.subr.mxu0 0.0
  %1367 = vmatpush2.msra.mxu0 0.0
  %1368 = vmatprep.subr.mxu0 0.0
  %1369 = vmatpush2.msra.mxu0 0.0
  %1370 = vmatprep.subr.mxu0 0.0
  %1371 = vmatpush2.msra.mxu0 0.0
  %1372 = vmatprep.subr.mxu0 0.0
  %1373 = vmatpush2.msra.mxu0 0.0
  %1374 = vmatprep.subr.mxu0 0.0
  %1375 = vmatpush2.msra.mxu0 0.0
  %1376 = vmatprep.mubr.f32.mxu0 0.0
  %1377 = vmatmul.mubr.f32.gmra.mxu0 %v1310
  %v1378 = vpop.f32.mrf.mxu0
  %v1379 = vadd.f32 0.0, %v1378
  %v1380 = vpop.f32.mrf.mxu0
  %1381 = vdwg.mxu0
  %v1383 = vsel %vm598, %v1308, 0
  %1385 = vmatprep.subr.mxu0 0.0
  %1386 = vmatpush1.msra.mxu0 0.0
  %1387 = vmatprep.subr.mxu0 0.0
  %1388 = vmatpush1.msra.mxu0 0.0
  %1389 = vmatprep.subr.mxu0 0.0
  %1390 = vmatpush1.msra.mxu0 0.0
  %1391 = vmatprep.subr.mxu0 0.0
  %1392 = vmatpush1.msra.mxu0 0.0
  %1393 = vmatprep.subr.mxu0 0.0
  %1394 = vmatpush1.msra.mxu0 0.0
  %1395 = vmatprep.subr.mxu0 0.0
  %1396 = vmatpush1.msra.mxu0 0.0
  %1397 = vmatprep.subr.mxu0 0.0
  %1398 = vmatpush1.msra.mxu0 0.0
  %1399 = vmatprep.subr.mxu0 0.0
  %1400 = vmatpush1.msra.mxu0 0.0
  %1401 = vmatprep.subr.mxu0 0.0
  %1402 = vmatpush1.msra.mxu0 0.0
  %1403 = vmatprep.subr.mxu0 0.0
  %1404 = vmatpush1.msra.mxu0 0.0
  %1405 = vmatprep.subr.mxu0 0.0
  %1406 = vmatpush1.msra.mxu0 0.0
  %1407 = vmatprep.subr.mxu0 0.0
  %1408 = vmatpush1.msra.mxu0 0.0
  %1409 = vmatprep.subr.mxu0 0.0
  %1410 = vmatpush1.msra.mxu0 0.0
  %1411 = vmatprep.subr.mxu0 0.0
  %1412 = vmatpush1.msra.mxu0 0.0
  %1413 = vmatprep.subr.mxu0 0.0
  %1414 = vmatpush1.msra.mxu0 0.0
  %1415 = vmatprep.subr.mxu0 0.0
  %1416 = vmatpush1.msra.mxu0 %v61
  %1417 = vmatprep.subr.mxu0 0.0
  %1418 = vmatpush2.msra.mxu0 0.0
  %1419 = vmatprep.subr.mxu0 0.0
  %1420 = vmatpush2.msra.mxu0 0.0
  %1421 = vmatprep.subr.mxu0 0.0
  %1422 = vmatpush2.msra.mxu0 0.0
  %1423 = vmatprep.subr.mxu0 0.0
  %1424 = vmatpush2.msra.mxu0 0.0
  %1425 = vmatprep.subr.mxu0 0.0
  %1426 = vmatpush2.msra.mxu0 0.0
  %1427 = vmatprep.subr.mxu0 0.0
  %1428 = vmatpush2.msra.mxu0 0.0
  %1429 = vmatprep.subr.mxu0 0.0
  %1430 = vmatpush2.msra.mxu0 0.0
  %1431 = vmatprep.subr.mxu0 0.0
  %1432 = vmatpush2.msra.mxu0 0.0
  %1433 = vmatprep.subr.mxu0 0.0
  %1434 = vmatpush2.msra.mxu0 0.0
  %1435 = vmatprep.subr.mxu0 0.0
  %1436 = vmatpush2.msra.mxu0 0.0
  %1437 = vmatprep.subr.mxu0 0.0
  %1438 = vmatpush2.msra.mxu0 0.0
  %1439 = vmatprep.subr.mxu0 0.0
  %1440 = vmatpush2.msra.mxu0 0.0
  %1441 = vmatprep.subr.mxu0 0.0
  %1442 = vmatpush2.msra.mxu0 0.0
  %1443 = vmatprep.subr.mxu0 0.0
  %1444 = vmatpush2.msra.mxu0 0.0
  %1445 = vmatprep.subr.mxu0 0.0
  %1446 = vmatpush2.msra.mxu0 0.0
  %1447 = vmatprep.subr.mxu0 0.0
  %1448 = vmatpush2.msra.mxu0 0.0
  %1449 = vmatprep.mubr.f32.mxu0 0.0
  %1450 = vmatmul.mubr.f32.gmra.mxu0 %v1383
  %v1451 = vpop.f32.mrf.mxu0
  %v1452 = vadd.f32 0.0, %v1451
  %v1453 = vpop.f32.mrf.mxu0
  %1454 = vdwg.mxu0
  %v1455 = vlaneseq
  %v1456 = vshrl.u32 %v1455, 7
  %v1457 = vsub.s32 0, %v1456
  %v1458 = vrot.slane %v1379, %v1457
  %v1459 = vmul.f32 %v1132, %v1458
  %v1460 = vmul.f32 %v1133, %v1458
  %v1461 = vmul.f32 %v1134, %v1458
  %v1462 = vmul.f32 %v1135, %v1458
  %v1463 = vlaneseq
  %v1464 = vshrl.u32 %v1463, 7
  %v1465 = vsub.s32 0, %v1464
  %v1466 = vrot.slane %v1452, %v1465
  %v1467 = vadd.f32 %v1459, %v1466
  %v1468 = vadd.f32 %v1460, %v1466
  %v1469 = vadd.f32 %v1461, %v1466
  %v1470 = vadd.f32 %v1462, %v1466
  %v1471 = vld [vmem:[%s0] sm:$0xff]
  %v1472 = vld [vmem:[%s0 + $0x8] sm:$0xff]
  %v1473 = vld [vmem:[%s0 + $0x10] sm:$0xff]
  %v1474 = vld [vmem:[%s0 + $0x18] sm:$0xff]
  %v1475 = vadd.f32 %v1471, %v1467
  %v1476 = vadd.f32 %v1472, %v1468
  %v1477 = vadd.f32 %v1473, %v1469
  %v1478 = vadd.f32 %v1474, %v1470
  %1479 = vst [vmem:[%s9] sm:$0xff] %v1475
  %1480 = vst [vmem:[%s9 + $0x8] sm:$0xff] %v1476
  %1481 = vst [vmem:[%s9 + $0x10] sm:$0xff] %v1477
  %1482 = vst [vmem:[%s9 + $0x18] sm:$0xff] %v1478
  // Predicated region
  $region38: #{b_block.1} parent=0 // pred_check
    _
  $region39: #{b_block.1} parent=0 // pred_check_branch
    %1484 = sbr.rel (0) target = $region41
  $region40: #{b_block.1} parent=0 // pred_region
    _
  $region41: #{b_block.1} parent=0 // pred_fallthru
    _
  // Predicated region
  $region42: #{b_block.1} parent=0 // pred_check
    _
  $region43: #{b_block.1} parent=0 // pred_check_branch
    %1486 = sbr.rel (0) target = $region45
  $region44: #{b_block.1} parent=0 // pred_region
    _
  $region45: #{b_block.1} parent=0 // pred_fallthru
    _

</llo_original>
